<compile_context>
chip_gen: v5e
topology: v5e:2x2
jax: 0.10.0
libtpu: 0.0.40
codegen_flags: <defaults>
</compile_context>

<pallas_src>
import functools
import math

import jax
import jax.numpy as jnp
from jax.experimental import pallas as pl
from jax.experimental.pallas import tpu as pltpu


# ----------------------------------------------------------------------------
# Helpers
# ----------------------------------------------------------------------------
def _shift_lanes(x, off, size):
    """result[..., p] = x[..., (p + off) % size] for a static Python int `off`.

    Wrapped-around positions are don't-care (the caller masks them to zero).
    """
    off = off % size
    if off == 0:
        return x
    return jnp.concatenate([x[:, off:], x[:, :off]], axis=1)


# ----------------------------------------------------------------------------
# Kernel
# ----------------------------------------------------------------------------
def _poscnn_dw3x3_kernel(col_ref, x_ref, w_ref, b_ref, o_ref, *, H, W, cc):
    """Depthwise 3x3 (stride 1, pad 1) + bias + residual for one (chan, batch) block.

    col_ref : (1, H*W)      int32 column (w) coordinate of each flattened position
    x_ref   : (1, tc, H*W)  input block (channels on sublanes, H*W on lanes)
    w_ref   : (tc, 9)       taps, flattened as kh*3 + kw
    b_ref   : (tc, 1)       bias
    o_ref   : (1, tc, H*W)  output block (conv + bias + residual)
    """
    HW = H * W
    tc = x_ref.shape[1]

    # Per-tap validity masks in output coordinates, shared across channel chunks.
    p_idx = jax.lax.broadcasted_iota(jnp.int32, (1, HW), 1)   # flattened index
    w_idx = col_ref[...]                                      # column (w) index

    def tap_mask(dh, dw):
        m = None

        def conj(a, b):
            return b if a is None else jnp.logical_and(a, b)

        if dh == -1:
            m = conj(m, p_idx >= W)          # needs h - 1 >= 0
        elif dh == 1:
            m = conj(m, p_idx < HW - W)      # needs h + 1 <= H - 1
        if dw == -1:
            m = conj(m, w_idx >= 1)          # needs w - 1 >= 0
        elif dw == 1:
            m = conj(m, w_idx <= W - 2)      # needs w + 1 <= W - 1
        return m

    masks = {(dh, dw): tap_mask(dh, dw) for dh in (-1, 0, 1) for dw in (-1, 0, 1)}

    # Process the channel block in small sublane chunks sliced from the ref so
    # the live vreg working set stays small (no spills); the conv + bias +
    # residual for a chunk is produced and stored before the next chunk loads.
    for c0 in range(0, tc, cc):
        nc = min(cc, tc - c0)
        xs = x_ref[0, c0:c0 + nc, :].astype(jnp.float32)      # (nc, HW)
        wc = w_ref[c0:c0 + nc, :].astype(jnp.float32)         # (nc, 9)
        bc = b_ref[c0:c0 + nc, :].astype(jnp.float32)         # (nc, 1)

        acc = xs + bc                                         # residual + bias fused
        for dh in (-1, 0, 1):
            for dw in (-1, 0, 1):
                tap = (dh + 1) * 3 + (dw + 1)
                shifted = _shift_lanes(xs, dh * W + dw, HW)
                contrib = shifted * wc[:, tap:tap + 1]
                m = masks[(dh, dw)]
                if m is not None:
                    contrib = jnp.where(m, contrib, 0.0)
                acc = acc + contrib

        o_ref[0, c0:c0 + nc, :] = acc.astype(o_ref.dtype)


# ----------------------------------------------------------------------------
# Wrapper
# ----------------------------------------------------------------------------
def poscnn_forward(x_nchw, weight_oihw, bias, *, s=1, ch_block=None,
                   block_cap_bytes=2 * 1024 * 1024,
                   vmem_limit_bytes=32 * 1024 * 1024):
    """PosCNN forward.

    x_nchw      : (B, C, H, W)   input, PyTorch NCHW convention
    weight_oihw : (C, 1, 3, 3)   depthwise conv weight (PyTorch layout)
    bias        : (C,)
    """
    if s != 1:
        # TODO(synk): strided (s > 1) PosCNN path (no residual) not implemented.
        raise NotImplementedError("PosCNN Pallas kernel currently supports s == 1 only")

    B, C, H, W = x_nchw.shape
    HW = H * W
    assert weight_oihw.shape == (C, 1, 3, 3), weight_oihw.shape
    assert bias.shape == (C,), bias.shape

    # Free reshapes only (no transposes / pads / extra HBM passes).
    x = x_nchw.reshape(B, C, HW)
    w9 = weight_oihw.reshape(C, 9)            # tap index kh*3 + kw
    b2 = bias.reshape(C, 1)
    col_idx = jnp.tile(jnp.arange(W, dtype=jnp.int32), H).reshape(1, HW)

    itemsize = x.dtype.itemsize

    # --- channel block: largest divisor of C (multiple of 8 if possible) whose
    # (tc, HW) block stays under block_cap_bytes (double-buffered in+out blocks
    # then fit comfortably inside scoped VMEM on every TPU generation).
    if ch_block is None:
        cands = [d for d in range(1, C + 1) if C % d == 0 and d % 8 == 0]
        if not cands:
            cands = [d for d in range(1, C + 1) if C % d == 0]
        fit = [d for d in cands if d * HW * itemsize <= block_cap_bytes]
        ch_block = max(fit) if fit else min(cands)
    tc = ch_block
    assert C % tc == 0 and (tc % 8 == 0 or tc == C), (C, tc)

    # --- in-kernel channel sub-chunk (bounds vreg pressure inside the kernel).
    cc = tc
    for cand in (32, 16, 8):
        if tc % cand == 0:
            cc = cand
            break

    grid = (C // tc, B)    # channel-blocks leading (dual-TC friendly), both parallel

    kern = functools.partial(_poscnn_dw3x3_kernel, H=H, W=W, cc=cc)
    out = pl.pallas_call(
        kern,
        out_shape=jax.ShapeDtypeStruct((B, C, HW), x.dtype),
        grid=grid,
        in_specs=[
            pl.BlockSpec((1, HW), lambda c, b: (0, 0)),            # column index
            pl.BlockSpec((1, tc, HW), lambda c, b: (b, c, 0)),     # x (also residual)
            pl.BlockSpec((tc, 9), lambda c, b: (c, 0)),            # taps
            pl.BlockSpec((tc, 1), lambda c, b: (c, 0)),            # bias
        ],
        out_specs=pl.BlockSpec((1, tc, HW), lambda c, b: (b, c, 0)),
        compiler_params=pltpu.CompilerParams(
            dimension_semantics=("parallel", "parallel"),
            vmem_limit_bytes=vmem_limit_bytes),
    )(col_idx, x, w9, b2)

    return out.reshape(B, C, H, W)


# ----------------------------------------------------------------------------
if __name__ == "__main__":
    key = jax.random.PRNGKey(0)
    B, C, H, W = 2, 256, 16, 16                  # embed_dim=256, 16x16 feature map
    k1, k2, k3 = jax.random.split(key, 3)
    x = jax.random.normal(k1, (B, C, H, W), jnp.float32)
    wgt = jax.random.normal(k2, (C, 1, 3, 3), jnp.float32) * math.sqrt(2.0 / 9.0)
    bias = jax.random.normal(k3, (C,), jnp.float32) * 0.02

    # Reference: depthwise conv (groups=C) + bias + residual, PyTorch semantics.
    ref = jax.lax.conv_general_dilated(
        x, wgt, window_strides=(1, 1), padding=((1, 1), (1, 1)),
        dimension_numbers=("NCHW", "OIHW", "NCHW"),
        feature_group_count=C) + bias[None, :, None, None] + x

    # Exercise explicit channel tiling (grid = (4, 2)) and the default heuristic.
    for kwargs in ({"ch_block": 64}, {}):
        out = poscnn_forward(x, wgt, bias, s=1, **kwargs)
        out = jax.block_until_ready(out)
        assert out.shape == (B, C, H, W), out.shape
        max_err = float(jnp.max(jnp.abs(out - ref)))
        assert max_err < 1e-4, f"mismatch vs reference conv ({kwargs}): max_err={max_err}"
        assert bool(jnp.all(jnp.isfinite(out)))

    print("KERNEL_OK")
</pallas_src>

<mosaic_0001>
module attributes {stable_mosaic.version = 11 : i64} {
  func.func @_poscnn_dw3x3_kernel(%arg0: i32, %arg1: i32, %arg2: memref<1x256xi32, #tpu.memory_space<vmem>>, %arg3: memref<1x64x256xf32, #tpu.memory_space<vmem>>, %arg4: memref<64x9xf32, #tpu.memory_space<vmem>>, %arg5: memref<64x1xf32, #tpu.memory_space<vmem>>, %arg6: memref<1x64x256xf32, #tpu.memory_space<vmem>>) attributes {dimension_semantics = [#tpu.dimension_semantics<parallel>, #tpu.dimension_semantics<parallel>], iteration_bounds = array<i64: 4, 2>, scalar_prefetch = 0 : i64, scratch_operands = 0 : i64, tpu.core_type = #tpu.core_type<tc>, window_params = [{pipeline_mode = #tpu.pipeline_mode<synchronous>, transform_indices = @transform_0, window_bounds = array<i64: 1, 256>}, {transform_indices = @transform_1, window_bounds = array<i64: 1, 64, 256>}, {transform_indices = @transform_2, window_bounds = array<i64: 64, 9>}, {transform_indices = @transform_3, window_bounds = array<i64: 64, 1>}, {transform_indices = @transform_4, window_bounds = array<i64: 1, 64, 256>}]} {
    %0 = tpu.iota {dimensions = array<i32: 1>} : vector<1x256xi32>
    %c0 = arith.constant 0 : index
    %c0_0 = arith.constant 0 : index
    %1 = vector.load %arg2[%c0, %c0_0] : memref<1x256xi32, #tpu.memory_space<vmem>>, vector<1x256xi32>
    %c16_i32 = arith.constant 16 : i32
    %2 = vector.broadcast %c16_i32 : i32 to vector<1x256xi32>
    %3 = arith.cmpi sge, %0, %2 : vector<1x256xi32>
    %c1_i32 = arith.constant 1 : i32
    %4 = vector.broadcast %c1_i32 : i32 to vector<1x256xi32>
    %5 = arith.cmpi sge, %1, %4 : vector<1x256xi32>
    %6 = arith.andi %3, %5 : vector<1x256xi1>
    %c16_i32_1 = arith.constant 16 : i32
    %7 = vector.broadcast %c16_i32_1 : i32 to vector<1x256xi32>
    %8 = arith.cmpi sge, %0, %7 : vector<1x256xi32>
    %c16_i32_2 = arith.constant 16 : i32
    %9 = vector.broadcast %c16_i32_2 : i32 to vector<1x256xi32>
    %10 = arith.cmpi sge, %0, %9 : vector<1x256xi32>
    %c14_i32 = arith.constant 14 : i32
    %11 = vector.broadcast %c14_i32 : i32 to vector<1x256xi32>
    %12 = arith.cmpi sle, %1, %11 : vector<1x256xi32>
    %13 = arith.andi %10, %12 : vector<1x256xi1>
    %c1_i32_3 = arith.constant 1 : i32
    %14 = vector.broadcast %c1_i32_3 : i32 to vector<1x256xi32>
    %15 = arith.cmpi sge, %1, %14 : vector<1x256xi32>
    %c14_i32_4 = arith.constant 14 : i32
    %16 = vector.broadcast %c14_i32_4 : i32 to vector<1x256xi32>
    %17 = arith.cmpi sle, %1, %16 : vector<1x256xi32>
    %c240_i32 = arith.constant 240 : i32
    %18 = vector.broadcast %c240_i32 : i32 to vector<1x256xi32>
    %19 = arith.cmpi slt, %0, %18 : vector<1x256xi32>
    %c1_i32_5 = arith.constant 1 : i32
    %20 = vector.broadcast %c1_i32_5 : i32 to vector<1x256xi32>
    %21 = arith.cmpi sge, %1, %20 : vector<1x256xi32>
    %22 = arith.andi %19, %21 : vector<1x256xi1>
    %c240_i32_6 = arith.constant 240 : i32
    %23 = vector.broadcast %c240_i32_6 : i32 to vector<1x256xi32>
    %24 = arith.cmpi slt, %0, %23 : vector<1x256xi32>
    %c240_i32_7 = arith.constant 240 : i32
    %25 = vector.broadcast %c240_i32_7 : i32 to vector<1x256xi32>
    %26 = arith.cmpi slt, %0, %25 : vector<1x256xi32>
    %c14_i32_8 = arith.constant 14 : i32
    %27 = vector.broadcast %c14_i32_8 : i32 to vector<1x256xi32>
    %28 = arith.cmpi sle, %1, %27 : vector<1x256xi32>
    %29 = arith.andi %26, %28 : vector<1x256xi1>
    %c0_9 = arith.constant 0 : index
    %c0_10 = arith.constant 0 : index
    %c0_11 = arith.constant 0 : index
    %30 = vector.load %arg3[%c0_9, %c0_10, %c0_11] : memref<1x64x256xf32, #tpu.memory_space<vmem>>, vector<1x32x256xf32>
    %31 = vector.shape_cast %30 : vector<1x32x256xf32> to vector<32x256xf32>
    %c0_12 = arith.constant 0 : index
    %c0_13 = arith.constant 0 : index
    %32 = vector.load %arg4[%c0_12, %c0_13] : memref<64x9xf32, #tpu.memory_space<vmem>>, vector<32x9xf32>
    %c0_14 = arith.constant 0 : index
    %c0_15 = arith.constant 0 : index
    %33 = vector.load %arg5[%c0_14, %c0_15] : memref<64x1xf32, #tpu.memory_space<vmem>>, vector<32x1xf32>
    %34 = vector.broadcast %33 : vector<32x1xf32> to vector<32x256xf32>
    %35 = arith.addf %31, %34 : vector<32x256xf32>
    %36 = vector.extract_strided_slice %31 {offsets = [0, 239], sizes = [32, 17], strides = [1, 1]} : vector<32x256xf32> to vector<32x17xf32>
    %37 = vector.extract_strided_slice %31 {offsets = [0, 0], sizes = [32, 239], strides = [1, 1]} : vector<32x256xf32> to vector<32x239xf32>
    %38 = tpu.concatenate %36, %37 in 1 : vector<32x17xf32>, vector<32x239xf32> -> vector<32x256xf32>
    %39 = vector.extract_strided_slice %32 {offsets = [0, 0], sizes = [32, 1], strides = [1, 1]} : vector<32x9xf32> to vector<32x1xf32>
    %40 = vector.broadcast %39 : vector<32x1xf32> to vector<32x256xf32>
    %41 = arith.mulf %38, %40 : vector<32x256xf32>
    %cst = arith.constant 0.000000e+00 : f32
    %42 = vector.shape_cast %6 : vector<1x256xi1> to vector<1x256xi1>
    %43 = vector.broadcast %42 : vector<1x256xi1> to vector<32x256xi1>
    %44 = vector.broadcast %cst : f32 to vector<32x256xf32>
    %45 = arith.select %43, %41, %44 : vector<32x256xi1>, vector<32x256xf32>
    %46 = arith.addf %35, %45 : vector<32x256xf32>
    %47 = vector.extract_strided_slice %31 {offsets = [0, 240], sizes = [32, 16], strides = [1, 1]} : vector<32x256xf32> to vector<32x16xf32>
    %48 = vector.extract_strided_slice %31 {offsets = [0, 0], sizes = [32, 240], strides = [1, 1]} : vector<32x256xf32> to vector<32x240xf32>
    %49 = tpu.concatenate %47, %48 in 1 : vector<32x16xf32>, vector<32x240xf32> -> vector<32x256xf32>
    %50 = vector.extract_strided_slice %32 {offsets = [0, 1], sizes = [32, 1], strides = [1, 1]} : vector<32x9xf32> to vector<32x1xf32>
    %51 = vector.broadcast %50 : vector<32x1xf32> to vector<32x256xf32>
    %52 = arith.mulf %49, %51 : vector<32x256xf32>
    %cst_16 = arith.constant 0.000000e+00 : f32
    %53 = vector.shape_cast %8 : vector<1x256xi1> to vector<1x256xi1>
    %54 = vector.broadcast %53 : vector<1x256xi1> to vector<32x256xi1>
    %55 = vector.broadcast %cst_16 : f32 to vector<32x256xf32>
    %56 = arith.select %54, %52, %55 : vector<32x256xi1>, vector<32x256xf32>
    %57 = arith.addf %46, %56 : vector<32x256xf32>
    %58 = vector.extract_strided_slice %31 {offsets = [0, 241], sizes = [32, 15], strides = [1, 1]} : vector<32x256xf32> to vector<32x15xf32>
    %59 = vector.extract_strided_slice %31 {offsets = [0, 0], sizes = [32, 241], strides = [1, 1]} : vector<32x256xf32> to vector<32x241xf32>
    %60 = tpu.concatenate %58, %59 in 1 : vector<32x15xf32>, vector<32x241xf32> -> vector<32x256xf32>
    %61 = vector.extract_strided_slice %32 {offsets = [0, 2], sizes = [32, 1], strides = [1, 1]} : vector<32x9xf32> to vector<32x1xf32>
    %62 = vector.broadcast %61 : vector<32x1xf32> to vector<32x256xf32>
    %63 = arith.mulf %60, %62 : vector<32x256xf32>
    %cst_17 = arith.constant 0.000000e+00 : f32
    %64 = vector.shape_cast %13 : vector<1x256xi1> to vector<1x256xi1>
    %65 = vector.broadcast %64 : vector<1x256xi1> to vector<32x256xi1>
    %66 = vector.broadcast %cst_17 : f32 to vector<32x256xf32>
    %67 = arith.select %65, %63, %66 : vector<32x256xi1>, vector<32x256xf32>
    %68 = arith.addf %57, %67 : vector<32x256xf32>
    %69 = vector.extract_strided_slice %31 {offsets = [0, 255], sizes = [32, 1], strides = [1, 1]} : vector<32x256xf32> to vector<32x1xf32>
    %70 = vector.extract_strided_slice %31 {offsets = [0, 0], sizes = [32, 255], strides = [1, 1]} : vector<32x256xf32> to vector<32x255xf32>
    %71 = tpu.concatenate %69, %70 in 1 : vector<32x1xf32>, vector<32x255xf32> -> vector<32x256xf32>
    %72 = vector.extract_strided_slice %32 {offsets = [0, 3], sizes = [32, 1], strides = [1, 1]} : vector<32x9xf32> to vector<32x1xf32>
    %73 = vector.broadcast %72 : vector<32x1xf32> to vector<32x256xf32>
    %74 = arith.mulf %71, %73 : vector<32x256xf32>
    %cst_18 = arith.constant 0.000000e+00 : f32
    %75 = vector.shape_cast %15 : vector<1x256xi1> to vector<1x256xi1>
    %76 = vector.broadcast %75 : vector<1x256xi1> to vector<32x256xi1>
    %77 = vector.broadcast %cst_18 : f32 to vector<32x256xf32>
    %78 = arith.select %76, %74, %77 : vector<32x256xi1>, vector<32x256xf32>
    %79 = arith.addf %68, %78 : vector<32x256xf32>
    %80 = vector.extract_strided_slice %32 {offsets = [0, 4], sizes = [32, 1], strides = [1, 1]} : vector<32x9xf32> to vector<32x1xf32>
    %81 = vector.broadcast %80 : vector<32x1xf32> to vector<32x256xf32>
    %82 = arith.mulf %31, %81 : vector<32x256xf32>
    %83 = arith.addf %79, %82 : vector<32x256xf32>
    %84 = vector.extract_strided_slice %31 {offsets = [0, 1], sizes = [32, 255], strides = [1, 1]} : vector<32x256xf32> to vector<32x255xf32>
    %85 = vector.extract_strided_slice %31 {offsets = [0, 0], sizes = [32, 1], strides = [1, 1]} : vector<32x256xf32> to vector<32x1xf32>
    %86 = tpu.concatenate %84, %85 in 1 : vector<32x255xf32>, vector<32x1xf32> -> vector<32x256xf32>
    %87 = vector.extract_strided_slice %32 {offsets = [0, 5], sizes = [32, 1], strides = [1, 1]} : vector<32x9xf32> to vector<32x1xf32>
    %88 = vector.broadcast %87 : vector<32x1xf32> to vector<32x256xf32>
    %89 = arith.mulf %86, %88 : vector<32x256xf32>
    %cst_19 = arith.constant 0.000000e+00 : f32
    %90 = vector.shape_cast %17 : vector<1x256xi1> to vector<1x256xi1>
    %91 = vector.broadcast %90 : vector<1x256xi1> to vector<32x256xi1>
    %92 = vector.broadcast %cst_19 : f32 to vector<32x256xf32>
    %93 = arith.select %91, %89, %92 : vector<32x256xi1>, vector<32x256xf32>
    %94 = arith.addf %83, %93 : vector<32x256xf32>
    %95 = vector.extract_strided_slice %31 {offsets = [0, 15], sizes = [32, 241], strides = [1, 1]} : vector<32x256xf32> to vector<32x241xf32>
    %96 = vector.extract_strided_slice %31 {offsets = [0, 0], sizes = [32, 15], strides = [1, 1]} : vector<32x256xf32> to vector<32x15xf32>
    %97 = tpu.concatenate %95, %96 in 1 : vector<32x241xf32>, vector<32x15xf32> -> vector<32x256xf32>
    %98 = vector.extract_strided_slice %32 {offsets = [0, 6], sizes = [32, 1], strides = [1, 1]} : vector<32x9xf32> to vector<32x1xf32>
    %99 = vector.broadcast %98 : vector<32x1xf32> to vector<32x256xf32>
    %100 = arith.mulf %97, %99 : vector<32x256xf32>
    %cst_20 = arith.constant 0.000000e+00 : f32
    %101 = vector.shape_cast %22 : vector<1x256xi1> to vector<1x256xi1>
    %102 = vector.broadcast %101 : vector<1x256xi1> to vector<32x256xi1>
    %103 = vector.broadcast %cst_20 : f32 to vector<32x256xf32>
    %104 = arith.select %102, %100, %103 : vector<32x256xi1>, vector<32x256xf32>
    %105 = arith.addf %94, %104 : vector<32x256xf32>
    %106 = vector.extract_strided_slice %31 {offsets = [0, 16], sizes = [32, 240], strides = [1, 1]} : vector<32x256xf32> to vector<32x240xf32>
    %107 = vector.extract_strided_slice %31 {offsets = [0, 0], sizes = [32, 16], strides = [1, 1]} : vector<32x256xf32> to vector<32x16xf32>
    %108 = tpu.concatenate %106, %107 in 1 : vector<32x240xf32>, vector<32x16xf32> -> vector<32x256xf32>
    %109 = vector.extract_strided_slice %32 {offsets = [0, 7], sizes = [32, 1], strides = [1, 1]} : vector<32x9xf32> to vector<32x1xf32>
    %110 = vector.broadcast %109 : vector<32x1xf32> to vector<32x256xf32>
    %111 = arith.mulf %108, %110 : vector<32x256xf32>
    %cst_21 = arith.constant 0.000000e+00 : f32
    %112 = vector.shape_cast %24 : vector<1x256xi1> to vector<1x256xi1>
    %113 = vector.broadcast %112 : vector<1x256xi1> to vector<32x256xi1>
    %114 = vector.broadcast %cst_21 : f32 to vector<32x256xf32>
    %115 = arith.select %113, %111, %114 : vector<32x256xi1>, vector<32x256xf32>
    %116 = arith.addf %105, %115 : vector<32x256xf32>
    %117 = vector.extract_strided_slice %31 {offsets = [0, 17], sizes = [32, 239], strides = [1, 1]} : vector<32x256xf32> to vector<32x239xf32>
    %118 = vector.extract_strided_slice %31 {offsets = [0, 0], sizes = [32, 17], strides = [1, 1]} : vector<32x256xf32> to vector<32x17xf32>
    %119 = tpu.concatenate %117, %118 in 1 : vector<32x239xf32>, vector<32x17xf32> -> vector<32x256xf32>
    %120 = vector.extract_strided_slice %32 {offsets = [0, 8], sizes = [32, 1], strides = [1, 1]} : vector<32x9xf32> to vector<32x1xf32>
    %121 = vector.broadcast %120 : vector<32x1xf32> to vector<32x256xf32>
    %122 = arith.mulf %119, %121 : vector<32x256xf32>
    %cst_22 = arith.constant 0.000000e+00 : f32
    %123 = vector.shape_cast %29 : vector<1x256xi1> to vector<1x256xi1>
    %124 = vector.broadcast %123 : vector<1x256xi1> to vector<32x256xi1>
    %125 = vector.broadcast %cst_22 : f32 to vector<32x256xf32>
    %126 = arith.select %124, %122, %125 : vector<32x256xi1>, vector<32x256xf32>
    %127 = arith.addf %116, %126 : vector<32x256xf32>
    %c0_23 = arith.constant 0 : index
    %c0_24 = arith.constant 0 : index
    %c0_25 = arith.constant 0 : index
    %128 = vector.load %arg6[%c0_23, %c0_24, %c0_25] : memref<1x64x256xf32, #tpu.memory_space<vmem>>, vector<1x32x256xf32>
    %129 = vector.shape_cast %128 : vector<1x32x256xf32> to vector<32x256xf32>
    %130 = vector.shape_cast %127 : vector<32x256xf32> to vector<1x32x256xf32>
    tpu.vector_store %arg6[%c0_23, %c0_24, %c0_25], %130 {strides = array<i32>} : memref<1x64x256xf32, #tpu.memory_space<vmem>>, vector<1x32x256xf32>,
    %c0_26 = arith.constant 0 : index
    %c32 = arith.constant 32 : index
    %c0_27 = arith.constant 0 : index
    %131 = vector.load %arg3[%c0_26, %c32, %c0_27] : memref<1x64x256xf32, #tpu.memory_space<vmem>>, vector<1x32x256xf32>
    %132 = vector.shape_cast %131 : vector<1x32x256xf32> to vector<32x256xf32>
    %c32_28 = arith.constant 32 : index
    %c0_29 = arith.constant 0 : index
    %133 = vector.load %arg4[%c32_28, %c0_29] : memref<64x9xf32, #tpu.memory_space<vmem>>, vector<32x9xf32>
    %c32_30 = arith.constant 32 : index
    %c0_31 = arith.constant 0 : index
    %134 = vector.load %arg5[%c32_30, %c0_31] : memref<64x1xf32, #tpu.memory_space<vmem>>, vector<32x1xf32>
    %135 = vector.broadcast %134 : vector<32x1xf32> to vector<32x256xf32>
    %136 = arith.addf %132, %135 : vector<32x256xf32>
    %137 = vector.extract_strided_slice %132 {offsets = [0, 239], sizes = [32, 17], strides = [1, 1]} : vector<32x256xf32> to vector<32x17xf32>
    %138 = vector.extract_strided_slice %132 {offsets = [0, 0], sizes = [32, 239], strides = [1, 1]} : vector<32x256xf32> to vector<32x239xf32>
    %139 = tpu.concatenate %137, %138 in 1 : vector<32x17xf32>, vector<32x239xf32> -> vector<32x256xf32>
    %140 = vector.extract_strided_slice %133 {offsets = [0, 0], sizes = [32, 1], strides = [1, 1]} : vector<32x9xf32> to vector<32x1xf32>
    %141 = vector.broadcast %140 : vector<32x1xf32> to vector<32x256xf32>
    %142 = arith.mulf %139, %141 : vector<32x256xf32>
    %cst_32 = arith.constant 0.000000e+00 : f32
    %143 = vector.shape_cast %6 : vector<1x256xi1> to vector<1x256xi1>
    %144 = vector.broadcast %143 : vector<1x256xi1> to vector<32x256xi1>
    %145 = vector.broadcast %cst_32 : f32 to vector<32x256xf32>
    %146 = arith.select %144, %142, %145 : vector<32x256xi1>, vector<32x256xf32>
    %147 = arith.addf %136, %146 : vector<32x256xf32>
    %148 = vector.extract_strided_slice %132 {offsets = [0, 240], sizes = [32, 16], strides = [1, 1]} : vector<32x256xf32> to vector<32x16xf32>
    %149 = vector.extract_strided_slice %132 {offsets = [0, 0], sizes = [32, 240], strides = [1, 1]} : vector<32x256xf32> to vector<32x240xf32>
    %150 = tpu.concatenate %148, %149 in 1 : vector<32x16xf32>, vector<32x240xf32> -> vector<32x256xf32>
    %151 = vector.extract_strided_slice %133 {offsets = [0, 1], sizes = [32, 1], strides = [1, 1]} : vector<32x9xf32> to vector<32x1xf32>
    %152 = vector.broadcast %151 : vector<32x1xf32> to vector<32x256xf32>
    %153 = arith.mulf %150, %152 : vector<32x256xf32>
    %cst_33 = arith.constant 0.000000e+00 : f32
    %154 = vector.shape_cast %8 : vector<1x256xi1> to vector<1x256xi1>
    %155 = vector.broadcast %154 : vector<1x256xi1> to vector<32x256xi1>
    %156 = vector.broadcast %cst_33 : f32 to vector<32x256xf32>
    %157 = arith.select %155, %153, %156 : vector<32x256xi1>, vector<32x256xf32>
    %158 = arith.addf %147, %157 : vector<32x256xf32>
    %159 = vector.extract_strided_slice %132 {offsets = [0, 241], sizes = [32, 15], strides = [1, 1]} : vector<32x256xf32> to vector<32x15xf32>
    %160 = vector.extract_strided_slice %132 {offsets = [0, 0], sizes = [32, 241], strides = [1, 1]} : vector<32x256xf32> to vector<32x241xf32>
    %161 = tpu.concatenate %159, %160 in 1 : vector<32x15xf32>, vector<32x241xf32> -> vector<32x256xf32>
    %162 = vector.extract_strided_slice %133 {offsets = [0, 2], sizes = [32, 1], strides = [1, 1]} : vector<32x9xf32> to vector<32x1xf32>
    %163 = vector.broadcast %162 : vector<32x1xf32> to vector<32x256xf32>
    %164 = arith.mulf %161, %163 : vector<32x256xf32>
    %cst_34 = arith.constant 0.000000e+00 : f32
    %165 = vector.shape_cast %13 : vector<1x256xi1> to vector<1x256xi1>
    %166 = vector.broadcast %165 : vector<1x256xi1> to vector<32x256xi1>
    %167 = vector.broadcast %cst_34 : f32 to vector<32x256xf32>
    %168 = arith.select %166, %164, %167 : vector<32x256xi1>, vector<32x256xf32>
    %169 = arith.addf %158, %168 : vector<32x256xf32>
    %170 = vector.extract_strided_slice %132 {offsets = [0, 255], sizes = [32, 1], strides = [1, 1]} : vector<32x256xf32> to vector<32x1xf32>
    %171 = vector.extract_strided_slice %132 {offsets = [0, 0], sizes = [32, 255], strides = [1, 1]} : vector<32x256xf32> to vector<32x255xf32>
    %172 = tpu.concatenate %170, %171 in 1 : vector<32x1xf32>, vector<32x255xf32> -> vector<32x256xf32>
    %173 = vector.extract_strided_slice %133 {offsets = [0, 3], sizes = [32, 1], strides = [1, 1]} : vector<32x9xf32> to vector<32x1xf32>
    %174 = vector.broadcast %173 : vector<32x1xf32> to vector<32x256xf32>
    %175 = arith.mulf %172, %174 : vector<32x256xf32>
    %cst_35 = arith.constant 0.000000e+00 : f32
    %176 = vector.shape_cast %15 : vector<1x256xi1> to vector<1x256xi1>
    %177 = vector.broadcast %176 : vector<1x256xi1> to vector<32x256xi1>
    %178 = vector.broadcast %cst_35 : f32 to vector<32x256xf32>
    %179 = arith.select %177, %175, %178 : vector<32x256xi1>, vector<32x256xf32>
    %180 = arith.addf %169, %179 : vector<32x256xf32>
    %181 = vector.extract_strided_slice %133 {offsets = [0, 4], sizes = [32, 1], strides = [1, 1]} : vector<32x9xf32> to vector<32x1xf32>
    %182 = vector.broadcast %181 : vector<32x1xf32> to vector<32x256xf32>
    %183 = arith.mulf %132, %182 : vector<32x256xf32>
    %184 = arith.addf %180, %183 : vector<32x256xf32>
    %185 = vector.extract_strided_slice %132 {offsets = [0, 1], sizes = [32, 255], strides = [1, 1]} : vector<32x256xf32> to vector<32x255xf32>
    %186 = vector.extract_strided_slice %132 {offsets = [0, 0], sizes = [32, 1], strides = [1, 1]} : vector<32x256xf32> to vector<32x1xf32>
    %187 = tpu.concatenate %185, %186 in 1 : vector<32x255xf32>, vector<32x1xf32> -> vector<32x256xf32>
    %188 = vector.extract_strided_slice %133 {offsets = [0, 5], sizes = [32, 1], strides = [1, 1]} : vector<32x9xf32> to vector<32x1xf32>
    %189 = vector.broadcast %188 : vector<32x1xf32> to vector<32x256xf32>
    %190 = arith.mulf %187, %189 : vector<32x256xf32>
    %cst_36 = arith.constant 0.000000e+00 : f32
    %191 = vector.shape_cast %17 : vector<1x256xi1> to vector<1x256xi1>
    %192 = vector.broadcast %191 : vector<1x256xi1> to vector<32x256xi1>
    %193 = vector.broadcast %cst_36 : f32 to vector<32x256xf32>
    %194 = arith.select %192, %190, %193 : vector<32x256xi1>, vector<32x256xf32>
    %195 = arith.addf %184, %194 : vector<32x256xf32>
    %196 = vector.extract_strided_slice %132 {offsets = [0, 15], sizes = [32, 241], strides = [1, 1]} : vector<32x256xf32> to vector<32x241xf32>
    %197 = vector.extract_strided_slice %132 {offsets = [0, 0], sizes = [32, 15], strides = [1, 1]} : vector<32x256xf32> to vector<32x15xf32>
    %198 = tpu.concatenate %196, %197 in 1 : vector<32x241xf32>, vector<32x15xf32> -> vector<32x256xf32>
    %199 = vector.extract_strided_slice %133 {offsets = [0, 6], sizes = [32, 1], strides = [1, 1]} : vector<32x9xf32> to vector<32x1xf32>
    %200 = vector.broadcast %199 : vector<32x1xf32> to vector<32x256xf32>
    %201 = arith.mulf %198, %200 : vector<32x256xf32>
    %cst_37 = arith.constant 0.000000e+00 : f32
    %202 = vector.shape_cast %22 : vector<1x256xi1> to vector<1x256xi1>
    %203 = vector.broadcast %202 : vector<1x256xi1> to vector<32x256xi1>
    %204 = vector.broadcast %cst_37 : f32 to vector<32x256xf32>
    %205 = arith.select %203, %201, %204 : vector<32x256xi1>, vector<32x256xf32>
    %206 = arith.addf %195, %205 : vector<32x256xf32>
    %207 = vector.extract_strided_slice %132 {offsets = [0, 16], sizes = [32, 240], strides = [1, 1]} : vector<32x256xf32> to vector<32x240xf32>
    %208 = vector.extract_strided_slice %132 {offsets = [0, 0], sizes = [32, 16], strides = [1, 1]} : vector<32x256xf32> to vector<32x16xf32>
    %209 = tpu.concatenate %207, %208 in 1 : vector<32x240xf32>, vector<32x16xf32> -> vector<32x256xf32>
    %210 = vector.extract_strided_slice %133 {offsets = [0, 7], sizes = [32, 1], strides = [1, 1]} : vector<32x9xf32> to vector<32x1xf32>
    %211 = vector.broadcast %210 : vector<32x1xf32> to vector<32x256xf32>
    %212 = arith.mulf %209, %211 : vector<32x256xf32>
    %cst_38 = arith.constant 0.000000e+00 : f32
    %213 = vector.shape_cast %24 : vector<1x256xi1> to vector<1x256xi1>
    %214 = vector.broadcast %213 : vector<1x256xi1> to vector<32x256xi1>
    %215 = vector.broadcast %cst_38 : f32 to vector<32x256xf32>
    %216 = arith.select %214, %212, %215 : vector<32x256xi1>, vector<32x256xf32>
    %217 = arith.addf %206, %216 : vector<32x256xf32>
    %218 = vector.extract_strided_slice %132 {offsets = [0, 17], sizes = [32, 239], strides = [1, 1]} : vector<32x256xf32> to vector<32x239xf32>
    %219 = vector.extract_strided_slice %132 {offsets = [0, 0], sizes = [32, 17], strides = [1, 1]} : vector<32x256xf32> to vector<32x17xf32>
    %220 = tpu.concatenate %218, %219 in 1 : vector<32x239xf32>, vector<32x17xf32> -> vector<32x256xf32>
    %221 = vector.extract_strided_slice %133 {offsets = [0, 8], sizes = [32, 1], strides = [1, 1]} : vector<32x9xf32> to vector<32x1xf32>
    %222 = vector.broadcast %221 : vector<32x1xf32> to vector<32x256xf32>
    %223 = arith.mulf %220, %222 : vector<32x256xf32>
    %cst_39 = arith.constant 0.000000e+00 : f32
    %224 = vector.shape_cast %29 : vector<1x256xi1> to vector<1x256xi1>
    %225 = vector.broadcast %224 : vector<1x256xi1> to vector<32x256xi1>
    %226 = vector.broadcast %cst_39 : f32 to vector<32x256xf32>
    %227 = arith.select %225, %223, %226 : vector<32x256xi1>, vector<32x256xf32>
    %228 = arith.addf %217, %227 : vector<32x256xf32>
    %c0_40 = arith.constant 0 : index
    %c32_41 = arith.constant 32 : index
    %c0_42 = arith.constant 0 : index
    %229 = vector.load %arg6[%c0_40, %c32_41, %c0_42] : memref<1x64x256xf32, #tpu.memory_space<vmem>>, vector<1x32x256xf32>
    %230 = vector.shape_cast %229 : vector<1x32x256xf32> to vector<32x256xf32>
    %231 = vector.shape_cast %228 : vector<32x256xf32> to vector<1x32x256xf32>
    tpu.vector_store %arg6[%c0_40, %c32_41, %c0_42], %231 {strides = array<i32>} : memref<1x64x256xf32, #tpu.memory_space<vmem>>, vector<1x32x256xf32>,
    return
  }
  func.func @transform_0(%arg0: i32, %arg1: i32) -> (i32, i32) {
    %c0_i32 = arith.constant 0 : i32
    %c0_i32_0 = arith.constant 0 : i32
    %c0_i32_1 = arith.constant 0 : i32
    return %c0_i32, %c0_i32_0 : i32, i32
  }
  func.func @transform_1(%arg0: i32, %arg1: i32) -> (i32, i32, i32) {
    %c0_i32 = arith.constant 0 : i32
    %c0_i32_0 = arith.constant 0 : i32
    return %arg1, %arg0, %c0_i32 : i32, i32, i32
  }
  func.func @transform_2(%arg0: i32, %arg1: i32) -> (i32, i32) {
    %c0_i32 = arith.constant 0 : i32
    %c0_i32_0 = arith.constant 0 : i32
    return %arg0, %c0_i32 : i32, i32
  }
  func.func @transform_3(%arg0: i32, %arg1: i32) -> (i32, i32) {
    %c0_i32 = arith.constant 0 : i32
    %c0_i32_0 = arith.constant 0 : i32
    return %arg0, %c0_i32 : i32, i32
  }
  func.func @transform_4(%arg0: i32, %arg1: i32) -> (i32, i32, i32) {
    %c0_i32 = arith.constant 0 : i32
    %c0_i32_0 = arith.constant 0 : i32
    return %arg1, %arg0, %c0_i32 : i32, i32, i32
  }
}

</mosaic_0001>

<llo_original>
// kernel: tpu_custom_call.1
$region0: #{tpu_custom_call.1}
  #allocation0 [shape = 'u32[]', space=smem, size = 0x4, offset = 0x4, fixed_abs, tag = 'smem constant byte address 0x4 - core index']
  #allocation1 [shape = 'u32[72,128]{1,0:T(1,128)}', space=vmem, size = 0x9000, scoped, tag = 'internal scratch']
  %s0 = inlined_call_operand.vmem [shape: s32[1,256], index: 0, kind: input, shape index: {}]
  %s1 = inlined_call_operand.hbm [shape: f32[2,256,256], index: 1, kind: input, shape index: {}]
  %s2 = inlined_call_operand.vmem [shape: f32[256,9], index: 2, kind: input, shape index: {}]
  %s3 = inlined_call_operand.vmem [shape: f32[256,1], index: 3, kind: input, shape index: {}]
  %s4 = inlined_call_operand.hbm [shape: f32[2,256,256], index: 4, kind: output, shape index: {}]
  %s5 = sld [smem:[#allocation0]]
  $region53: #{tpu_custom_call.1} parent=0
    _
  %s7 = ssub.s32 1, %s5
  %s8 = scalar_select 0, %s7, %s5
  $region1: #{tpu_custom_call.1} parent=0
    #allocation2 [shape = 'u8[131072]{0}', space=vmem, size = 0x20000, scoped, tag = 'input window, operand 1']
    #allocation3 [shape = 's32[2]{0}', space=sflag, size = 0x8, scoped, tag = 'scoped memory for tpu_custom_call.1']
    #allocation4 [shape = 's32[2]{0}', space=sflag, size = 0x8, scoped, tag = 'scoped memory for tpu_custom_call.1']
    #allocation5 [shape = 'u8[131072]{0}', space=vmem, size = 0x20000, scoped, tag = 'output window, operand 0']
    %9 = vsyncpa [#allocation3], 0
    %s10 = scalar_lea.sflag [#allocation3], 1
    %11 = vsyncpa %s10, 0
    %12 = vsyncpa [#allocation4], 0
    %s13 = scalar_lea.sflag [#allocation4], 1
    %14 = vsyncpa %s13, 0
    loop: start=0, step=1, limit=10
    $region2: #{tpu_custom_call.1} parent=1 // loop_pre_header
      _
    $region3: #{tpu_custom_call.1} parent=1 // loop_header
      %s16 = sphi 0, %s20
      %p17 = scmp.ge.s32.totalorder %s16, 10
      %s23 = sphi 0, %s35
      %s24 = sphi 0, %s31
      %s25 = sphi 0, %s23
      %s26 = sphi 0, %s24
      %s27 = sphi 0, %s25
      %s28 = sphi 0, %s26
      %s36 = sphi 0, %s36
      %s38 = sphi 0, %s36
      %s39 = sphi 0, %s38
      %s53 = sphi 0, %s39
      %s61 = sphi 0, %s63
      %s64 = sphi 0, %s61
      %s65 = sphi 0, %s64
      %s81 = sphi 0, %s65
      %s87 = sphi 0, %s89
      %s90 = sphi 0, %s87
      %s91 = sphi 0, %s90
      %s107 = sphi 0, %s91
      %s113 = sphi 0, %s115
      %s116 = sphi 0, %s113
      %s117 = sphi 0, %s116
      %s133 = sphi 0, %s117
      %s141 = sphi 0, %s143
      %s144 = sphi 0, %s141
      %s145 = sphi 0, %s144
      %s161 = sphi 0, %s145
    $region4: #{tpu_custom_call.1} parent=1 // loop_header_branch
      %19 = sbr.rel (%p17) target = $region8
    $region5: #{tpu_custom_call.1} parent=1 // loop_body
      %s21 = ssub.s32 %s16, 1
      %s22 = ssub.s32 %s16, 2
      %s29 = sadd.s32 1, %s24
      %p30 = scmp.ge.s32.totalorder %s29, 2
      %s31 = scalar_select %p30, 0, %s29
      %s32 = sadd.s32 1, %s23
      %s33 = scalar_select %p30, %s32, %s23
      %p34 = scmp.ge.s32.totalorder %s33, 4
      %s35 = scalar_select %p34, 0, %s33
      %s37 = sadd.s32 %s36, 1
      %p40 = scmp.eq.s32.totalorder %s16, 7
      %p41 = scmp.ne.s32.totalorder %s36, %s38
      %p42 = scmp.eq.s32.totalorder %s16, 0
      %p43 = por %p41, %p42
      %p44 = scmp.ne.s32.totalorder %s36, %s38
      %p45 = scmp.eq.s32.totalorder %s21, 7
      %p46 = por %p44, %p45
      %p47 = scmp.ne.s32.totalorder %s38, %s39
      %p48 = scmp.eq.s32.totalorder %s21, 0
      %p49 = por %p47, %p48
      %p50 = scmp.ne.s32.totalorder %s38, %s39
      %p51 = scmp.eq.s32.totalorder %s22, 7
      %p52 = por %p50, %p51
      %p54 = scmp.ne.s32.totalorder %s39, %s53
      %p55 = scmp.eq.s32.totalorder %s22, 0
      %p56 = por %p54, %p55
      %s57 = ssub.s32 %s24, %s31
      %s58 = ssub.s32 %s23, %s35
      %s59 = sor.u32 %s57, %s58
      %p60 = scmp.eq.s32.totalorder %s59, 0
      %s62 = sadd.s32 %s61, 1
      %s63 = scalar_select %p60, %s61, %s62
      %p66 = pneg %p60
      %p67 = scmp.eq.s32.totalorder %s16, 7
      %p68 = por %p66, %p67
      %p69 = scmp.ne.s32.totalorder %s61, %s64
      %p70 = scmp.eq.s32.totalorder %s16, 0
      %p71 = por %p69, %p70
      %p72 = scmp.ne.s32.totalorder %s61, %s64
      %p73 = scmp.eq.s32.totalorder %s21, 7
      %p74 = por %p72, %p73
      %p75 = scmp.ne.s32.totalorder %s64, %s65
      %p76 = scmp.eq.s32.totalorder %s21, 0
      %p77 = por %p75, %p76
      %p78 = scmp.ne.s32.totalorder %s64, %s65
      %p79 = scmp.eq.s32.totalorder %s22, 7
      %p80 = por %p78, %p79
      %p82 = scmp.ne.s32.totalorder %s65, %s81
      %p83 = scmp.eq.s32.totalorder %s22, 0
      %p84 = por %p82, %p83
      %s85 = ssub.s32 %s23, %s35
      %p86 = scmp.eq.s32.totalorder %s85, 0
      %s88 = sadd.s32 %s87, 1
      %s89 = scalar_select %p86, %s87, %s88
      %p92 = pneg %p86
      %p93 = scmp.eq.s32.totalorder %s16, 7
      %p94 = por %p92, %p93
      %p95 = scmp.ne.s32.totalorder %s87, %s90
      %p96 = scmp.eq.s32.totalorder %s16, 0
      %p97 = por %p95, %p96
      %p98 = scmp.ne.s32.totalorder %s87, %s90
      %p99 = scmp.eq.s32.totalorder %s21, 7
      %p100 = por %p98, %p99
      %p101 = scmp.ne.s32.totalorder %s90, %s91
      %p102 = scmp.eq.s32.totalorder %s21, 0
      %p103 = por %p101, %p102
      %p104 = scmp.ne.s32.totalorder %s90, %s91
      %p105 = scmp.eq.s32.totalorder %s22, 7
      %p106 = por %p104, %p105
      %p108 = scmp.ne.s32.totalorder %s91, %s107
      %p109 = scmp.eq.s32.totalorder %s22, 0
      %p110 = por %p108, %p109
      %s111 = ssub.s32 %s23, %s35
      %p112 = scmp.eq.s32.totalorder %s111, 0
      %s114 = sadd.s32 %s113, 1
      %s115 = scalar_select %p112, %s113, %s114
      %p118 = pneg %p112
      %p119 = scmp.eq.s32.totalorder %s16, 7
      %p120 = por %p118, %p119
      %p121 = scmp.ne.s32.totalorder %s113, %s116
      %p122 = scmp.eq.s32.totalorder %s16, 0
      %p123 = por %p121, %p122
      %p124 = scmp.ne.s32.totalorder %s113, %s116
      %p125 = scmp.eq.s32.totalorder %s21, 7
      %p126 = por %p124, %p125
      %p127 = scmp.ne.s32.totalorder %s116, %s117
      %p128 = scmp.eq.s32.totalorder %s21, 0
      %p129 = por %p127, %p128
      %p130 = scmp.ne.s32.totalorder %s116, %s117
      %p131 = scmp.eq.s32.totalorder %s22, 7
      %p132 = por %p130, %p131
      %p134 = scmp.ne.s32.totalorder %s117, %s133
      %p135 = scmp.eq.s32.totalorder %s22, 0
      %p136 = por %p134, %p135
      %s137 = ssub.s32 %s24, %s31
      %s138 = ssub.s32 %s23, %s35
      %s139 = sor.u32 %s137, %s138
      %p140 = scmp.eq.s32.totalorder %s139, 0
      %s142 = sadd.s32 %s141, 1
      %s143 = scalar_select %p140, %s141, %s142
      %p146 = pneg %p140
      %p147 = scmp.eq.s32.totalorder %s16, 7
      %p148 = por %p146, %p147
      %p149 = scmp.ne.s32.totalorder %s141, %s144
      %p150 = scmp.eq.s32.totalorder %s16, 0
      %p151 = por %p149, %p150
      %p152 = scmp.ne.s32.totalorder %s141, %s144
      %p153 = scmp.eq.s32.totalorder %s21, 7
      %p154 = por %p152, %p153
      %p155 = scmp.ne.s32.totalorder %s144, %s145
      %p156 = scmp.eq.s32.totalorder %s21, 0
      %p157 = por %p155, %p156
      %p158 = scmp.ne.s32.totalorder %s144, %s145
      %p159 = scmp.eq.s32.totalorder %s22, 7
      %p160 = por %p158, %p159
      %p162 = scmp.ne.s32.totalorder %s145, %s161
      %p163 = scmp.eq.s32.totalorder %s22, 0
      %p164 = por %p162, %p163
      %p165 = scmp.le.s32.totalorder 1, %s16
      %p166 = scmp.lt.s32.totalorder %s16, 9
      %p167 = pnand %p165, %p166
      %p168 = pneg %p167
      // Predicated region
      $region9: #{tpu_custom_call.1} parent=5 // pred_check
        _
      $region10: #{tpu_custom_call.1} parent=5 // pred_check_branch
        %170 = sbr.rel (%p167) target = $region12
      $region11: #{tpu_custom_call.1} parent=5 // pred_region
        %s171 = ssub.s32 %s16, 1
        // Predicated region
        $region13: #{tpu_custom_call.1} parent=11 // pred_check
          %p172 = pneg %p49
        $region14: #{tpu_custom_call.1} parent=11 // pred_check_branch
          %174 = sbr.rel (%p172) target = $region16
        $region15: #{tpu_custom_call.1} parent=11 // pred_region
          _
        $region16: #{tpu_custom_call.1} parent=11 // pred_fallthru
          _
      $region12: #{tpu_custom_call.1} parent=5 // pred_fallthru
        _
      %p175 = scmp.lt.s32.totalorder %s16, 8
      // Predicated region
      $region17: #{tpu_custom_call.1} parent=5 // pred_check
        %p176 = pneg %p175
      $region18: #{tpu_custom_call.1} parent=5 // pred_check_branch
        %178 = sbr.rel (%p176) target = $region20
      $region19: #{tpu_custom_call.1} parent=5 // pred_region
        // Predicated region
        $region21: #{tpu_custom_call.1} parent=19 // pred_check
          %p179 = pneg %p71
        $region22: #{tpu_custom_call.1} parent=19 // pred_check_branch
          %181 = sbr.rel (%p179) target = $region24
        $region23: #{tpu_custom_call.1} parent=19 // pred_region
          %s182 = sand.u32 %s61, 1
          %s183 = scalar_lea.sflag [#allocation3], %s182
          %s184 = sand.u32 %s61, 1
          %s185 = smul.addr %s184, 128
          %s186 = scalar_lea.vmem [#allocation2], %s185
          %s187 = smul.u32 8, %s23
          %189 = vsyncadd %s183, 0
          %s190 = smul.addr %s187, 2
          %s191 = smul.addr %s24, 64
          %s192 = sadd.s32 %s190, %s191
          %s193 = smul.addr %s192, 8
          %s194 = scalar_lea.hbm %s1, %s193
          %s195 = sshll.u32 %s194, 4
          %s196 = int_to_ptr.hbm [resolvable:$true] %s195
          %s197 = sshll.u32 %s186, 4
          %s198 = int_to_ptr.vmem [resolvable:$true] %s197
          %203 = dma.hbm_to_vmem [thread:$0]  %s196, 2048, %s198, %s183, 256, 256, 16
        $region24: #{tpu_custom_call.1} parent=19 // pred_fallthru
          _
        // Predicated region
        $region25: #{tpu_custom_call.1} parent=19 // pred_check
          %p204 = pneg %p97
        $region26: #{tpu_custom_call.1} parent=19 // pred_check_branch
          %206 = sbr.rel (%p204) target = $region28
        $region27: #{tpu_custom_call.1} parent=19 // pred_region
          %s207 = smul.u32 8, %s23
          %p208 = scmp.lt.s32.totalorder %s207, 31
          %s209 = scalar_select %p208, %s207, 31
          %s210 = smul.addr %s209, 8
          %s211 = scalar_lea.vmem %s2, %s210
          %s212 = smul.u32 8, %s23
        $region28: #{tpu_custom_call.1} parent=19 // pred_fallthru
          _
        // Predicated region
        $region29: #{tpu_custom_call.1} parent=19 // pred_check
          %p213 = pneg %p123
        $region30: #{tpu_custom_call.1} parent=19 // pred_check_branch
          %215 = sbr.rel (%p213) target = $region32
        $region31: #{tpu_custom_call.1} parent=19 // pred_region
          %s216 = smul.u32 8, %s23
          %p217 = scmp.lt.s32.totalorder %s216, 31
          %s218 = scalar_select %p217, %s216, 31
          %s219 = smul.addr %s218, 8
          %s220 = scalar_lea.vmem %s3, %s219
          %s221 = smul.u32 8, %s23
        $region32: #{tpu_custom_call.1} parent=19 // pred_fallthru
          _
      $region20: #{tpu_custom_call.1} parent=5 // pred_fallthru
        _
      %p222 = scmp.le.s32.totalorder 1, %s16
      %p223 = scmp.lt.s32.totalorder %s16, 9
      %p224 = pnand %p222, %p223
      %p225 = pneg %p224
      // Predicated region
      $region33: #{tpu_custom_call.1} parent=5 // pred_check
        _
      $region34: #{tpu_custom_call.1} parent=5 // pred_check_branch
        %227 = sbr.rel (%p224) target = $region36
      $region35: #{tpu_custom_call.1} parent=5 // pred_region
        %s228 = ssub.s32 %s16, 1
        %s229 = sand.u32 %s64, 1
        %s230 = scalar_lea.sflag [#allocation3], %s229
        %s231 = sand.u32 %s64, 1
        %s232 = smul.addr %s231, 128
        %s233 = scalar_lea.vmem [#allocation2], %s232
        // Predicated region
        $region37: #{tpu_custom_call.1} parent=35 // pred_check
          %p234 = pneg %p77
        $region38: #{tpu_custom_call.1} parent=35 // pred_check_branch
          %236 = sbr.rel (%p234) target = $region40
        $region39: #{tpu_custom_call.1} parent=35 // pred_region
          %238 = dma.done %s230, 2048
        $region40: #{tpu_custom_call.1} parent=35 // pred_fallthru
          _
        %p239 = pneg %p49
        %p240 = pneg %p46
        %s241 = sand.u32 %s64, 1
        %s242 = scalar_lea.sflag [#allocation3], %s241
        %s243 = sand.u32 %s64, 1
        %s244 = smul.addr %s243, 128
        %s245 = scalar_lea.vmem [#allocation2], %s244
        %p246 = pneg %p77
        %p247 = pneg %p74
        %s248 = smul.u32 8, %s25
        %p249 = scmp.lt.s32.totalorder %s248, 31
        %s250 = scalar_select %p249, %s248, 31
        %s251 = smul.addr %s250, 8
        %s252 = scalar_lea.vmem %s2, %s251
        %p253 = pneg %p103
        %p254 = pneg %p100
        %s255 = smul.u32 8, %s25
        %p256 = scmp.lt.s32.totalorder %s255, 31
        %s257 = scalar_select %p256, %s255, 31
        %s258 = smul.addr %s257, 8
        %s259 = scalar_lea.vmem %s3, %s258
        %p260 = pneg %p129
        %p261 = pneg %p126
        %p262 = pneg %p157
        %p263 = pneg %p154
        %s264 = sand.u32 %s144, 1
        %s265 = scalar_lea.sflag [#allocation4], %s264
        %s266 = sand.u32 %s144, 1
        %s267 = smul.addr %s266, 128
        %s268 = scalar_lea.vmem [#allocation5], %s267
        %s269 = smul.u32 8, %s25
        %s270 = smul.u32 8, %s25
        %p271 = scmp.lt.s32.totalorder %s270, 31
        %s272 = scalar_select %p271, %s270, 31
        %s273 = smul.addr %s272, 8
        %s274 = scalar_lea.vmem %s2, %s273
        %s275 = smul.u32 8, %s25
        %s276 = smul.u32 8, %s25
        %p277 = scmp.lt.s32.totalorder %s276, 31
        %s278 = scalar_select %p277, %s276, 31
        %s279 = smul.addr %s278, 8
        %s280 = scalar_lea.vmem %s3, %s279
        %s281 = smul.u32 8, %s25
        %s282 = smul.u32 8, %s25
        %v283 = vlaneseq
        %v284 = vand.u32 %v283, 127
        %v285 = vadd.s32 %v284, 128
        %v286 = vld [vmem:[%s0] sm:$0x3]
        %vm287 = vcmp.ge.s32.totalorder %v284, 16
        %vm288 = vcmp.ge.s32.totalorder %v285, 16
        %vm289 = vcmp.ge.s32.totalorder %v286, 1
        %v290 = vsel %vm289, 1, 0
        %v291 = vperm.slane %v290, 0
        %v292 = vperm.slane %v290, 1
        %vm293 = vcmp.ne.s32.totalorder %v291, 0
        %vm294 = vcmp.ne.s32.totalorder %v292, 0
        %vm295 = vmand %vm287, %vm293
        %vm296 = vmand %vm288, %vm294
        %vm297 = vcmp.le.s32.totalorder %v286, 14
        %v298 = vsel %vm297, 1, 0
        %v299 = vperm.slane %v298, 0
        %v300 = vperm.slane %v298, 1
        %vm301 = vcmp.ne.s32.totalorder %v299, 0
        %vm302 = vcmp.ne.s32.totalorder %v300, 0
        %vm303 = vmand %vm287, %vm301
        %vm304 = vmand %vm288, %vm302
        %vm305 = vcmp.lt.s32.totalorder %v284, 240
        %vm306 = vcmp.lt.s32.totalorder %v285, 240
        %vm307 = vmand %vm305, %vm293
        %vm308 = vmand %vm306, %vm294
        %vm309 = vmand %vm305, %vm301
        %vm310 = vmand %vm306, %vm302
        %v311 = vld [vmem:[%s233] sm:$0xff]
        %v312 = vld [vmem:[%s233 + $0x8] sm:$0xff]
        %v313 = vld [vmem:[%s233 + $0x10] sm:$0xff]
        %v314 = vld [vmem:[%s233 + $0x18] sm:$0xff]
        %v315 = vld [vmem:[%s233 + $0x20] sm:$0xff]
        %v316 = vld [vmem:[%s233 + $0x28] sm:$0xff]
        %v317 = vld [vmem:[%s233 + $0x30] sm:$0xff]
        %v318 = vld [vmem:[%s233 + $0x38] sm:$0xff]
        %v319 = vld [vmem:[%s274] sm:$0xff]
        %v320 = vld [vmem:[%s274 + $0x8] sm:$0xff]
        %v321 = vld [vmem:[%s274 + $0x10] sm:$0xff]
        %v322 = vld [vmem:[%s274 + $0x18] sm:$0xff]
        %v323 = vld [vmem:[%s280] sm:$0xff]
        %v324 = vld [vmem:[%s280 + $0x8] sm:$0xff]
        %v325 = vld [vmem:[%s280 + $0x10] sm:$0xff]
        %v326 = vld [vmem:[%s280 + $0x18] sm:$0xff]
        %328 = vset.pattern.permute.xlu0 0
        %329 = vperm.xlu0 %328, %v323
        %v330 = vpop.permute.xlu0 %329
        %333 = vset.pattern.permute.xlu0 0
        %334 = vperm.xlu0 %333, %v324
        %v335 = vpop.permute.xlu0 %334
        %338 = vset.pattern.permute.xlu0 0
        %339 = vperm.xlu0 %338, %v325
        %v340 = vpop.permute.xlu0 %339
        %343 = vset.pattern.permute.xlu0 0
        %344 = vperm.xlu0 %343, %v326
        %v345 = vpop.permute.xlu0 %344
        %v347 = vadd.f32 %v311, %v330
        %v348 = vadd.f32 %v312, %v330
        %v349 = vadd.f32 %v313, %v335
        %v350 = vadd.f32 %v314, %v335
        %v351 = vadd.f32 %v315, %v340
        %v352 = vadd.f32 %v316, %v340
        %v353 = vadd.f32 %v317, %v345
        %v354 = vadd.f32 %v318, %v345
        %359 = vrot.lane.b32.xlu0 %v312, 17
        %v360 = vpop.permute.xlu0 %359
        %361 = vrot.lane.b32.xlu0 %v314, 17
        %v362 = vpop.permute.xlu0 %361
        %363 = vrot.lane.b32.xlu0 %v316, 17
        %v364 = vpop.permute.xlu0 %363
        %365 = vrot.lane.b32.xlu0 %v318, 17
        %v366 = vpop.permute.xlu0 %365
        %375 = vrot.lane.b32.xlu0 %v311, 17
        %v376 = vpop.permute.xlu0 %375
        %377 = vrot.lane.b32.xlu0 %v313, 17
        %v378 = vpop.permute.xlu0 %377
        %379 = vrot.lane.b32.xlu0 %v315, 17
        %v380 = vpop.permute.xlu0 %379
        %381 = vrot.lane.b32.xlu0 %v317, 17
        %v382 = vpop.permute.xlu0 %381
        %vm383 = vcmask 138240
        %v384 = vsel %vm383, %v376, %v360
        %v385 = vsel %vm383, %v378, %v362
        %v386 = vsel %vm383, %v380, %v364
        %v387 = vsel %vm383, %v382, %v366
        %v396 = vsel %vm383, %v360, %v376
        %v397 = vsel %vm383, %v362, %v378
        %v398 = vsel %vm383, %v364, %v380
        %v399 = vsel %vm383, %v366, %v382
        %401 = vset.pattern.permute.xlu0 0
        %402 = vperm.xlu0 %401, %v319
        %v403 = vpop.permute.xlu0 %402
        %406 = vset.pattern.permute.xlu0 0
        %407 = vperm.xlu0 %406, %v320
        %v408 = vpop.permute.xlu0 %407
        %411 = vset.pattern.permute.xlu0 0
        %412 = vperm.xlu0 %411, %v321
        %v413 = vpop.permute.xlu0 %412
        %416 = vset.pattern.permute.xlu0 0
        %417 = vperm.xlu0 %416, %v322
        %v418 = vpop.permute.xlu0 %417
        %v420 = vmul.f32 %v396, %v403
        %v421 = vmul.f32 %v384, %v403
        %v422 = vmul.f32 %v397, %v408
        %v423 = vmul.f32 %v385, %v408
        %v424 = vmul.f32 %v398, %v413
        %v425 = vmul.f32 %v386, %v413
        %v426 = vmul.f32 %v399, %v418
        %v427 = vmul.f32 %v387, %v418
        %v428 = vsel %vm295, 1, 0
        %v429 = vsel %vm296, 1, 0
        %v430 = vperm.slane %v428, 0
        %v431 = vperm.slane %v429, 0
        %vm432 = vcmp.eq.s32.totalorder %v430, 1
        %vm433 = vcmp.eq.s32.totalorder %v431, 1
        %v434 = vsel %vm432, %v420, 0.0
        %v435 = vsel %vm433, %v421, 0.0
        %v436 = vsel %vm432, %v422, 0.0
        %v437 = vsel %vm433, %v423, 0.0
        %v438 = vsel %vm432, %v424, 0.0
        %v439 = vsel %vm433, %v425, 0.0
        %v440 = vsel %vm432, %v426, 0.0
        %v441 = vsel %vm433, %v427, 0.0
        %v442 = vadd.f32 %v347, %v434
        %v443 = vadd.f32 %v348, %v435
        %v444 = vadd.f32 %v349, %v436
        %v445 = vadd.f32 %v350, %v437
        %v446 = vadd.f32 %v351, %v438
        %v447 = vadd.f32 %v352, %v439
        %v448 = vadd.f32 %v353, %v440
        %v449 = vadd.f32 %v354, %v441
        %450 = vrot.lane.b32.xlu0 %v312, 16
        %v451 = vpop.permute.xlu0 %450
        %452 = vrot.lane.b32.xlu0 %v314, 16
        %v453 = vpop.permute.xlu0 %452
        %454 = vrot.lane.b32.xlu0 %v316, 16
        %v455 = vpop.permute.xlu0 %454
        %456 = vrot.lane.b32.xlu0 %v318, 16
        %v457 = vpop.permute.xlu0 %456
        %462 = vrot.lane.b32.xlu0 %v311, 16
        %v463 = vpop.permute.xlu0 %462
        %464 = vrot.lane.b32.xlu0 %v313, 16
        %v465 = vpop.permute.xlu0 %464
        %466 = vrot.lane.b32.xlu0 %v315, 16
        %v467 = vpop.permute.xlu0 %466
        %468 = vrot.lane.b32.xlu0 %v317, 16
        %v469 = vpop.permute.xlu0 %468
        %vm470 = vcmask 130048
        %v471 = vsel %vm470, %v463, %v451
        %v472 = vsel %vm470, %v465, %v453
        %v473 = vsel %vm470, %v467, %v455
        %v474 = vsel %vm470, %v469, %v457
        %v483 = vsel %vm470, %v451, %v463
        %v484 = vsel %vm470, %v453, %v465
        %v485 = vsel %vm470, %v455, %v467
        %v486 = vsel %vm470, %v457, %v469
        %487 = vset.pattern.permute.xlu0 1
        %488 = vperm.xlu0 %487, %v319
        %v489 = vpop.permute.xlu0 %488
        %491 = vset.pattern.permute.xlu0 1
        %492 = vperm.xlu0 %491, %v320
        %v493 = vpop.permute.xlu0 %492
        %495 = vset.pattern.permute.xlu0 1
        %496 = vperm.xlu0 %495, %v321
        %v497 = vpop.permute.xlu0 %496
        %499 = vset.pattern.permute.xlu0 1
        %500 = vperm.xlu0 %499, %v322
        %v501 = vpop.permute.xlu0 %500
        %v503 = vmul.f32 %v483, %v489
        %v504 = vmul.f32 %v471, %v489
        %v505 = vmul.f32 %v484, %v493
        %v506 = vmul.f32 %v472, %v493
        %v507 = vmul.f32 %v485, %v497
        %v508 = vmul.f32 %v473, %v497
        %v509 = vmul.f32 %v486, %v501
        %v510 = vmul.f32 %v474, %v501
        %v511 = vsel %vm287, 1, 0
        %v512 = vsel %vm288, 1, 0
        %vm513 = vcmp.eq.s32.totalorder %v511, 1
        %vm514 = vcmp.eq.s32.totalorder %v512, 1
        %v515 = vsel %vm513, %v503, 0.0
        %v516 = vsel %vm514, %v504, 0.0
        %v517 = vsel %vm513, %v505, 0.0
        %v518 = vsel %vm514, %v506, 0.0
        %v519 = vsel %vm513, %v507, 0.0
        %v520 = vsel %vm514, %v508, 0.0
        %v521 = vsel %vm513, %v509, 0.0
        %v522 = vsel %vm514, %v510, 0.0
        %v523 = vadd.f32 %v442, %v515
        %v524 = vadd.f32 %v443, %v516
        %v525 = vadd.f32 %v444, %v517
        %v526 = vadd.f32 %v445, %v518
        %v527 = vadd.f32 %v446, %v519
        %v528 = vadd.f32 %v447, %v520
        %v529 = vadd.f32 %v448, %v521
        %v530 = vadd.f32 %v449, %v522
        %531 = vrot.lane.b32.xlu0 %v312, 15
        %v532 = vpop.permute.xlu0 %531
        %533 = vrot.lane.b32.xlu0 %v314, 15
        %v534 = vpop.permute.xlu0 %533
        %535 = vrot.lane.b32.xlu0 %v316, 15
        %v536 = vpop.permute.xlu0 %535
        %537 = vrot.lane.b32.xlu0 %v318, 15
        %v538 = vpop.permute.xlu0 %537
        %543 = vrot.lane.b32.xlu0 %v311, 15
        %v544 = vpop.permute.xlu0 %543
        %545 = vrot.lane.b32.xlu0 %v313, 15
        %v546 = vpop.permute.xlu0 %545
        %547 = vrot.lane.b32.xlu0 %v315, 15
        %v548 = vpop.permute.xlu0 %547
        %549 = vrot.lane.b32.xlu0 %v317, 15
        %v550 = vpop.permute.xlu0 %549
        %vm551 = vcmask 121856
        %v552 = vsel %vm551, %v544, %v532
        %v553 = vsel %vm551, %v546, %v534
        %v554 = vsel %vm551, %v548, %v536
        %v555 = vsel %vm551, %v550, %v538
        %v564 = vsel %vm551, %v532, %v544
        %v565 = vsel %vm551, %v534, %v546
        %v566 = vsel %vm551, %v536, %v548
        %v567 = vsel %vm551, %v538, %v550
        %568 = vset.pattern.permute.xlu0 2
        %569 = vperm.xlu0 %568, %v319
        %v570 = vpop.permute.xlu0 %569
        %572 = vset.pattern.permute.xlu0 2
        %573 = vperm.xlu0 %572, %v320
        %v574 = vpop.permute.xlu0 %573
        %576 = vset.pattern.permute.xlu0 2
        %577 = vperm.xlu0 %576, %v321
        %v578 = vpop.permute.xlu0 %577
        %580 = vset.pattern.permute.xlu0 2
        %581 = vperm.xlu0 %580, %v322
        %v582 = vpop.permute.xlu0 %581
        %v584 = vmul.f32 %v564, %v570
        %v585 = vmul.f32 %v552, %v570
        %v586 = vmul.f32 %v565, %v574
        %v587 = vmul.f32 %v553, %v574
        %v588 = vmul.f32 %v566, %v578
        %v589 = vmul.f32 %v554, %v578
        %v590 = vmul.f32 %v567, %v582
        %v591 = vmul.f32 %v555, %v582
        %v592 = vsel %vm303, 1, 0
        %v593 = vsel %vm304, 1, 0
        %v594 = vperm.slane %v592, 0
        %v595 = vperm.slane %v593, 0
        %vm596 = vcmp.eq.s32.totalorder %v594, 1
        %vm597 = vcmp.eq.s32.totalorder %v595, 1
        %v598 = vsel %vm596, %v584, 0.0
        %v599 = vsel %vm597, %v585, 0.0
        %v600 = vsel %vm596, %v586, 0.0
        %v601 = vsel %vm597, %v587, 0.0
        %v602 = vsel %vm596, %v588, 0.0
        %v603 = vsel %vm597, %v589, 0.0
        %v604 = vsel %vm596, %v590, 0.0
        %v605 = vsel %vm597, %v591, 0.0
        %v606 = vadd.f32 %v523, %v598
        %v607 = vadd.f32 %v524, %v599
        %v608 = vadd.f32 %v525, %v600
        %v609 = vadd.f32 %v526, %v601
        %v610 = vadd.f32 %v527, %v602
        %v611 = vadd.f32 %v528, %v603
        %v612 = vadd.f32 %v529, %v604
        %v613 = vadd.f32 %v530, %v605
        %614 = vrot.lane.b32.xlu0 %v312, 1
        %v615 = vpop.permute.xlu0 %614
        %616 = vrot.lane.b32.xlu0 %v314, 1
        %v617 = vpop.permute.xlu0 %616
        %618 = vrot.lane.b32.xlu0 %v316, 1
        %v619 = vpop.permute.xlu0 %618
        %620 = vrot.lane.b32.xlu0 %v318, 1
        %v621 = vpop.permute.xlu0 %620
        %626 = vrot.lane.b32.xlu0 %v311, 1
        %v627 = vpop.permute.xlu0 %626
        %628 = vrot.lane.b32.xlu0 %v313, 1
        %v629 = vpop.permute.xlu0 %628
        %630 = vrot.lane.b32.xlu0 %v315, 1
        %v631 = vpop.permute.xlu0 %630
        %632 = vrot.lane.b32.xlu0 %v317, 1
        %v633 = vpop.permute.xlu0 %632
        %vm634 = vcmask 7168
        %v635 = vsel %vm634, %v627, %v615
        %v636 = vsel %vm634, %v629, %v617
        %v637 = vsel %vm634, %v631, %v619
        %v638 = vsel %vm634, %v633, %v621
        %v647 = vsel %vm634, %v615, %v627
        %v648 = vsel %vm634, %v617, %v629
        %v649 = vsel %vm634, %v619, %v631
        %v650 = vsel %vm634, %v621, %v633
        %651 = vset.pattern.permute.xlu0 3
        %652 = vperm.xlu0 %651, %v319
        %v653 = vpop.permute.xlu0 %652
        %655 = vset.pattern.permute.xlu0 3
        %656 = vperm.xlu0 %655, %v320
        %v657 = vpop.permute.xlu0 %656
        %659 = vset.pattern.permute.xlu0 3
        %660 = vperm.xlu0 %659, %v321
        %v661 = vpop.permute.xlu0 %660
        %663 = vset.pattern.permute.xlu0 3
        %664 = vperm.xlu0 %663, %v322
        %v665 = vpop.permute.xlu0 %664
        %v667 = vmul.f32 %v647, %v653
        %v668 = vmul.f32 %v635, %v653
        %v669 = vmul.f32 %v648, %v657
        %v670 = vmul.f32 %v636, %v657
        %v671 = vmul.f32 %v649, %v661
        %v672 = vmul.f32 %v637, %v661
        %v673 = vmul.f32 %v650, %v665
        %v674 = vmul.f32 %v638, %v665
        %vm675 = vcmp.eq.s32.totalorder %v291, 1
        %vm676 = vcmp.eq.s32.totalorder %v292, 1
        %v677 = vsel %vm675, %v667, 0.0
        %v678 = vsel %vm676, %v668, 0.0
        %v679 = vsel %vm675, %v669, 0.0
        %v680 = vsel %vm676, %v670, 0.0
        %v681 = vsel %vm675, %v671, 0.0
        %v682 = vsel %vm676, %v672, 0.0
        %v683 = vsel %vm675, %v673, 0.0
        %v684 = vsel %vm676, %v674, 0.0
        %v685 = vadd.f32 %v606, %v677
        %v686 = vadd.f32 %v607, %v678
        %v687 = vadd.f32 %v608, %v679
        %v688 = vadd.f32 %v609, %v680
        %v689 = vadd.f32 %v610, %v681
        %v690 = vadd.f32 %v611, %v682
        %v691 = vadd.f32 %v612, %v683
        %v692 = vadd.f32 %v613, %v684
        %693 = vset.pattern.permute.xlu0 4
        %694 = vperm.xlu0 %693, %v319
        %v695 = vpop.permute.xlu0 %694
        %697 = vset.pattern.permute.xlu0 4
        %698 = vperm.xlu0 %697, %v320
        %v699 = vpop.permute.xlu0 %698
        %701 = vset.pattern.permute.xlu0 4
        %702 = vperm.xlu0 %701, %v321
        %v703 = vpop.permute.xlu0 %702
        %705 = vset.pattern.permute.xlu0 4
        %706 = vperm.xlu0 %705, %v322
        %v707 = vpop.permute.xlu0 %706
        %v709 = vmul.f32 %v311, %v695
        %v710 = vmul.f32 %v312, %v695
        %v711 = vmul.f32 %v313, %v699
        %v712 = vmul.f32 %v314, %v699
        %v713 = vmul.f32 %v315, %v703
        %v714 = vmul.f32 %v316, %v703
        %v715 = vmul.f32 %v317, %v707
        %v716 = vmul.f32 %v318, %v707
        %v717 = vadd.f32 %v685, %v709
        %v718 = vadd.f32 %v686, %v710
        %v719 = vadd.f32 %v687, %v711
        %v720 = vadd.f32 %v688, %v712
        %v721 = vadd.f32 %v689, %v713
        %v722 = vadd.f32 %v690, %v714
        %v723 = vadd.f32 %v691, %v715
        %v724 = vadd.f32 %v692, %v716
        %725 = vrot.lane.b32.xlu0 %v311, 127
        %v726 = vpop.permute.xlu0 %725
        %727 = vrot.lane.b32.xlu0 %v312, 127
        %v728 = vpop.permute.xlu0 %727
        %729 = vrot.lane.b32.xlu0 %v313, 127
        %v730 = vpop.permute.xlu0 %729
        %731 = vrot.lane.b32.xlu0 %v314, 127
        %v732 = vpop.permute.xlu0 %731
        %733 = vrot.lane.b32.xlu0 %v315, 127
        %v734 = vpop.permute.xlu0 %733
        %735 = vrot.lane.b32.xlu0 %v316, 127
        %v736 = vpop.permute.xlu0 %735
        %737 = vrot.lane.b32.xlu0 %v317, 127
        %v738 = vpop.permute.xlu0 %737
        %739 = vrot.lane.b32.xlu0 %v318, 127
        %v740 = vpop.permute.xlu0 %739
        %vm741 = vcmask 1039360
        %v742 = vsel %vm741, %v726, %v728
        %v743 = vsel %vm741, %v730, %v732
        %v744 = vsel %vm741, %v734, %v736
        %v745 = vsel %vm741, %v738, %v740
        %v758 = vsel %vm741, %v728, %v726
        %v759 = vsel %vm741, %v732, %v730
        %v760 = vsel %vm741, %v736, %v734
        %v761 = vsel %vm741, %v740, %v738
        %762 = vset.pattern.permute.xlu0 5
        %763 = vperm.xlu0 %762, %v319
        %v764 = vpop.permute.xlu0 %763
        %766 = vset.pattern.permute.xlu0 5
        %767 = vperm.xlu0 %766, %v320
        %v768 = vpop.permute.xlu0 %767
        %770 = vset.pattern.permute.xlu0 5
        %771 = vperm.xlu0 %770, %v321
        %v772 = vpop.permute.xlu0 %771
        %774 = vset.pattern.permute.xlu0 5
        %775 = vperm.xlu0 %774, %v322
        %v776 = vpop.permute.xlu0 %775
        %v778 = vmul.f32 %v742, %v764
        %v779 = vmul.f32 %v758, %v764
        %v780 = vmul.f32 %v743, %v768
        %v781 = vmul.f32 %v759, %v768
        %v782 = vmul.f32 %v744, %v772
        %v783 = vmul.f32 %v760, %v772
        %v784 = vmul.f32 %v745, %v776
        %v785 = vmul.f32 %v761, %v776
        %vm786 = vcmp.eq.s32.totalorder %v299, 1
        %vm787 = vcmp.eq.s32.totalorder %v300, 1
        %v788 = vsel %vm786, %v778, 0.0
        %v789 = vsel %vm787, %v779, 0.0
        %v790 = vsel %vm786, %v780, 0.0
        %v791 = vsel %vm787, %v781, 0.0
        %v792 = vsel %vm786, %v782, 0.0
        %v793 = vsel %vm787, %v783, 0.0
        %v794 = vsel %vm786, %v784, 0.0
        %v795 = vsel %vm787, %v785, 0.0
        %v796 = vadd.f32 %v717, %v788
        %v797 = vadd.f32 %v718, %v789
        %v798 = vadd.f32 %v719, %v790
        %v799 = vadd.f32 %v720, %v791
        %v800 = vadd.f32 %v721, %v792
        %v801 = vadd.f32 %v722, %v793
        %v802 = vadd.f32 %v723, %v794
        %v803 = vadd.f32 %v724, %v795
        %804 = vrot.lane.b32.xlu0 %v311, 113
        %v805 = vpop.permute.xlu0 %804
        %806 = vrot.lane.b32.xlu0 %v312, 113
        %v807 = vpop.permute.xlu0 %806
        %808 = vrot.lane.b32.xlu0 %v313, 113
        %v809 = vpop.permute.xlu0 %808
        %810 = vrot.lane.b32.xlu0 %v314, 113
        %v811 = vpop.permute.xlu0 %810
        %812 = vrot.lane.b32.xlu0 %v315, 113
        %v813 = vpop.permute.xlu0 %812
        %814 = vrot.lane.b32.xlu0 %v316, 113
        %v815 = vpop.permute.xlu0 %814
        %816 = vrot.lane.b32.xlu0 %v317, 113
        %v817 = vpop.permute.xlu0 %816
        %818 = vrot.lane.b32.xlu0 %v318, 113
        %v819 = vpop.permute.xlu0 %818
        %vm820 = vcmask 924672
        %v821 = vsel %vm820, %v805, %v807
        %v822 = vsel %vm820, %v809, %v811
        %v823 = vsel %vm820, %v813, %v815
        %v824 = vsel %vm820, %v817, %v819
        %v837 = vsel %vm820, %v807, %v805
        %v838 = vsel %vm820, %v811, %v809
        %v839 = vsel %vm820, %v815, %v813
        %v840 = vsel %vm820, %v819, %v817
        %841 = vset.pattern.permute.xlu0 6
        %842 = vperm.xlu0 %841, %v319
        %v843 = vpop.permute.xlu0 %842
        %845 = vset.pattern.permute.xlu0 6
        %846 = vperm.xlu0 %845, %v320
        %v847 = vpop.permute.xlu0 %846
        %849 = vset.pattern.permute.xlu0 6
        %850 = vperm.xlu0 %849, %v321
        %v851 = vpop.permute.xlu0 %850
        %853 = vset.pattern.permute.xlu0 6
        %854 = vperm.xlu0 %853, %v322
        %v855 = vpop.permute.xlu0 %854
        %v857 = vmul.f32 %v821, %v843
        %v858 = vmul.f32 %v837, %v843
        %v859 = vmul.f32 %v822, %v847
        %v860 = vmul.f32 %v838, %v847
        %v861 = vmul.f32 %v823, %v851
        %v862 = vmul.f32 %v839, %v851
        %v863 = vmul.f32 %v824, %v855
        %v864 = vmul.f32 %v840, %v855
        %v865 = vsel %vm307, 1, 0
        %v866 = vsel %vm308, 1, 0
        %v867 = vperm.slane %v865, 0
        %v868 = vperm.slane %v866, 0
        %vm869 = vcmp.eq.s32.totalorder %v867, 1
        %vm870 = vcmp.eq.s32.totalorder %v868, 1
        %v871 = vsel %vm869, %v857, 0.0
        %v872 = vsel %vm870, %v858, 0.0
        %v873 = vsel %vm869, %v859, 0.0
        %v874 = vsel %vm870, %v860, 0.0
        %v875 = vsel %vm869, %v861, 0.0
        %v876 = vsel %vm870, %v862, 0.0
        %v877 = vsel %vm869, %v863, 0.0
        %v878 = vsel %vm870, %v864, 0.0
        %v879 = vadd.f32 %v796, %v871
        %v880 = vadd.f32 %v797, %v872
        %v881 = vadd.f32 %v798, %v873
        %v882 = vadd.f32 %v799, %v874
        %v883 = vadd.f32 %v800, %v875
        %v884 = vadd.f32 %v801, %v876
        %v885 = vadd.f32 %v802, %v877
        %v886 = vadd.f32 %v803, %v878
        %887 = vrot.lane.b32.xlu0 %v311, 112
        %v888 = vpop.permute.xlu0 %887
        %889 = vrot.lane.b32.xlu0 %v312, 112
        %v890 = vpop.permute.xlu0 %889
        %891 = vrot.lane.b32.xlu0 %v313, 112
        %v892 = vpop.permute.xlu0 %891
        %893 = vrot.lane.b32.xlu0 %v314, 112
        %v894 = vpop.permute.xlu0 %893
        %895 = vrot.lane.b32.xlu0 %v315, 112
        %v896 = vpop.permute.xlu0 %895
        %897 = vrot.lane.b32.xlu0 %v316, 112
        %v898 = vpop.permute.xlu0 %897
        %899 = vrot.lane.b32.xlu0 %v317, 112
        %v900 = vpop.permute.xlu0 %899
        %901 = vrot.lane.b32.xlu0 %v318, 112
        %v902 = vpop.permute.xlu0 %901
        %vm903 = vcmask 916480
        %v904 = vsel %vm903, %v888, %v890
        %v905 = vsel %vm903, %v892, %v894
        %v906 = vsel %vm903, %v896, %v898
        %v907 = vsel %vm903, %v900, %v902
        %v920 = vsel %vm903, %v890, %v888
        %v921 = vsel %vm903, %v894, %v892
        %v922 = vsel %vm903, %v898, %v896
        %v923 = vsel %vm903, %v902, %v900
        %924 = vset.pattern.permute.xlu0 7
        %925 = vperm.xlu0 %924, %v319
        %v926 = vpop.permute.xlu0 %925
        %928 = vset.pattern.permute.xlu0 7
        %929 = vperm.xlu0 %928, %v320
        %v930 = vpop.permute.xlu0 %929
        %932 = vset.pattern.permute.xlu0 7
        %933 = vperm.xlu0 %932, %v321
        %v934 = vpop.permute.xlu0 %933
        %936 = vset.pattern.permute.xlu0 7
        %937 = vperm.xlu0 %936, %v322
        %v938 = vpop.permute.xlu0 %937
        %v940 = vmul.f32 %v904, %v926
        %v941 = vmul.f32 %v920, %v926
        %v942 = vmul.f32 %v905, %v930
        %v943 = vmul.f32 %v921, %v930
        %v944 = vmul.f32 %v906, %v934
        %v945 = vmul.f32 %v922, %v934
        %v946 = vmul.f32 %v907, %v938
        %v947 = vmul.f32 %v923, %v938
        %v948 = vsel %vm305, 1, 0
        %v949 = vsel %vm306, 1, 0
        %vm950 = vcmp.eq.s32.totalorder %v948, 1
        %vm951 = vcmp.eq.s32.totalorder %v949, 1
        %v952 = vsel %vm950, %v940, 0.0
        %v953 = vsel %vm951, %v941, 0.0
        %v954 = vsel %vm950, %v942, 0.0
        %v955 = vsel %vm951, %v943, 0.0
        %v956 = vsel %vm950, %v944, 0.0
        %v957 = vsel %vm951, %v945, 0.0
        %v958 = vsel %vm950, %v946, 0.0
        %v959 = vsel %vm951, %v947, 0.0
        %v960 = vadd.f32 %v879, %v952
        %v961 = vadd.f32 %v880, %v953
        %v962 = vadd.f32 %v881, %v954
        %v963 = vadd.f32 %v882, %v955
        %v964 = vadd.f32 %v883, %v956
        %v965 = vadd.f32 %v884, %v957
        %v966 = vadd.f32 %v885, %v958
        %v967 = vadd.f32 %v886, %v959
        %968 = vrot.lane.b32.xlu0 %v311, 111
        %v969 = vpop.permute.xlu0 %968
        %970 = vrot.lane.b32.xlu0 %v312, 111
        %v971 = vpop.permute.xlu0 %970
        %972 = vrot.lane.b32.xlu0 %v313, 111
        %v973 = vpop.permute.xlu0 %972
        %974 = vrot.lane.b32.xlu0 %v314, 111
        %v975 = vpop.permute.xlu0 %974
        %976 = vrot.lane.b32.xlu0 %v315, 111
        %v977 = vpop.permute.xlu0 %976
        %978 = vrot.lane.b32.xlu0 %v316, 111
        %v979 = vpop.permute.xlu0 %978
        %980 = vrot.lane.b32.xlu0 %v317, 111
        %v981 = vpop.permute.xlu0 %980
        %982 = vrot.lane.b32.xlu0 %v318, 111
        %v983 = vpop.permute.xlu0 %982
        %vm984 = vcmask 908288
        %v985 = vsel %vm984, %v969, %v971
        %v986 = vsel %vm984, %v973, %v975
        %v987 = vsel %vm984, %v977, %v979
        %v988 = vsel %vm984, %v981, %v983
        %v1001 = vsel %vm984, %v971, %v969
        %v1002 = vsel %vm984, %v975, %v973
        %v1003 = vsel %vm984, %v979, %v977
        %v1004 = vsel %vm984, %v983, %v981
        %1005 = vset.pattern.permute.xlu0 8
        %1006 = vperm.xlu0 %1005, %v319
        %v1007 = vpop.permute.xlu0 %1006
        %1009 = vset.pattern.permute.xlu0 8
        %1010 = vperm.xlu0 %1009, %v320
        %v1011 = vpop.permute.xlu0 %1010
        %1013 = vset.pattern.permute.xlu0 8
        %1014 = vperm.xlu0 %1013, %v321
        %v1015 = vpop.permute.xlu0 %1014
        %1017 = vset.pattern.permute.xlu0 8
        %1018 = vperm.xlu0 %1017, %v322
        %v1019 = vpop.permute.xlu0 %1018
        %v1021 = vmul.f32 %v985, %v1007
        %v1022 = vmul.f32 %v1001, %v1007
        %v1023 = vmul.f32 %v986, %v1011
        %v1024 = vmul.f32 %v1002, %v1011
        %v1025 = vmul.f32 %v987, %v1015
        %v1026 = vmul.f32 %v1003, %v1015
        %v1027 = vmul.f32 %v988, %v1019
        %v1028 = vmul.f32 %v1004, %v1019
        %v1029 = vsel %vm309, 1, 0
        %v1030 = vsel %vm310, 1, 0
        %v1031 = vperm.slane %v1029, 0
        %v1032 = vperm.slane %v1030, 0
        %vm1033 = vcmp.eq.s32.totalorder %v1031, 1
        %vm1034 = vcmp.eq.s32.totalorder %v1032, 1
        %v1035 = vsel %vm1033, %v1021, 0.0
        %v1036 = vsel %vm1034, %v1022, 0.0
        %v1037 = vsel %vm1033, %v1023, 0.0
        %v1038 = vsel %vm1034, %v1024, 0.0
        %v1039 = vsel %vm1033, %v1025, 0.0
        %v1040 = vsel %vm1034, %v1026, 0.0
        %v1041 = vsel %vm1033, %v1027, 0.0
        %v1042 = vsel %vm1034, %v1028, 0.0
        %v1043 = vadd.f32 %v960, %v1035
        %v1044 = vadd.f32 %v961, %v1036
        %v1045 = vadd.f32 %v962, %v1037
        %v1046 = vadd.f32 %v963, %v1038
        %v1047 = vadd.f32 %v964, %v1039
        %v1048 = vadd.f32 %v965, %v1040
        %v1049 = vadd.f32 %v966, %v1041
        %v1050 = vadd.f32 %v967, %v1042
        %1051 = vst [vmem:[%s268] sm:$0xff] %v1043
        %1052 = vst [vmem:[%s268 + $0x8] sm:$0xff] %v1044
        %1053 = vst [vmem:[%s268 + $0x10] sm:$0xff] %v1045
        %1054 = vst [vmem:[%s268 + $0x18] sm:$0xff] %v1046
        %1055 = vst [vmem:[%s268 + $0x20] sm:$0xff] %v1047
        %1056 = vst [vmem:[%s268 + $0x28] sm:$0xff] %v1048
        %1057 = vst [vmem:[%s268 + $0x30] sm:$0xff] %v1049
        %1058 = vst [vmem:[%s268 + $0x38] sm:$0xff] %v1050
        %v1059 = vld [vmem:[%s233 + $0x40] sm:$0xff]
        %v1060 = vld [vmem:[%s233 + $0x48] sm:$0xff]
        %v1061 = vld [vmem:[%s233 + $0x50] sm:$0xff]
        %v1062 = vld [vmem:[%s233 + $0x58] sm:$0xff]
        %v1063 = vld [vmem:[%s233 + $0x60] sm:$0xff]
        %v1064 = vld [vmem:[%s233 + $0x68] sm:$0xff]
        %v1065 = vld [vmem:[%s233 + $0x70] sm:$0xff]
        %v1066 = vld [vmem:[%s233 + $0x78] sm:$0xff]
        %v1067 = vld [vmem:[%s274 + $0x20] sm:$0xff]
        %v1068 = vld [vmem:[%s274 + $0x28] sm:$0xff]
        %v1069 = vld [vmem:[%s274 + $0x30] sm:$0xff]
        %v1070 = vld [vmem:[%s274 + $0x38] sm:$0xff]
        %v1071 = vld [vmem:[%s280 + $0x20] sm:$0xff]
        %v1072 = vld [vmem:[%s280 + $0x28] sm:$0xff]
        %v1073 = vld [vmem:[%s280 + $0x30] sm:$0xff]
        %v1074 = vld [vmem:[%s280 + $0x38] sm:$0xff]
        %1076 = vset.pattern.permute.xlu0 0
        %1077 = vperm.xlu0 %1076, %v1071
        %v1078 = vpop.permute.xlu0 %1077
        %1081 = vset.pattern.permute.xlu0 0
        %1082 = vperm.xlu0 %1081, %v1072
        %v1083 = vpop.permute.xlu0 %1082
        %1086 = vset.pattern.permute.xlu0 0
        %1087 = vperm.xlu0 %1086, %v1073
        %v1088 = vpop.permute.xlu0 %1087
        %1091 = vset.pattern.permute.xlu0 0
        %1092 = vperm.xlu0 %1091, %v1074
        %v1093 = vpop.permute.xlu0 %1092
        %v1095 = vadd.f32 %v1059, %v1078
        %v1096 = vadd.f32 %v1060, %v1078
        %v1097 = vadd.f32 %v1061, %v1083
        %v1098 = vadd.f32 %v1062, %v1083
        %v1099 = vadd.f32 %v1063, %v1088
        %v1100 = vadd.f32 %v1064, %v1088
        %v1101 = vadd.f32 %v1065, %v1093
        %v1102 = vadd.f32 %v1066, %v1093
        %1107 = vrot.lane.b32.xlu0 %v1060, 17
        %v1108 = vpop.permute.xlu0 %1107
        %1109 = vrot.lane.b32.xlu0 %v1062, 17
        %v1110 = vpop.permute.xlu0 %1109
        %1111 = vrot.lane.b32.xlu0 %v1064, 17
        %v1112 = vpop.permute.xlu0 %1111
        %1113 = vrot.lane.b32.xlu0 %v1066, 17
        %v1114 = vpop.permute.xlu0 %1113
        %1123 = vrot.lane.b32.xlu0 %v1059, 17
        %v1124 = vpop.permute.xlu0 %1123
        %1125 = vrot.lane.b32.xlu0 %v1061, 17
        %v1126 = vpop.permute.xlu0 %1125
        %1127 = vrot.lane.b32.xlu0 %v1063, 17
        %v1128 = vpop.permute.xlu0 %1127
        %1129 = vrot.lane.b32.xlu0 %v1065, 17
        %v1130 = vpop.permute.xlu0 %1129
        %v1131 = vsel %vm383, %v1124, %v1108
        %v1132 = vsel %vm383, %v1126, %v1110
        %v1133 = vsel %vm383, %v1128, %v1112
        %v1134 = vsel %vm383, %v1130, %v1114
        %v1143 = vsel %vm383, %v1108, %v1124
        %v1144 = vsel %vm383, %v1110, %v1126
        %v1145 = vsel %vm383, %v1112, %v1128
        %v1146 = vsel %vm383, %v1114, %v1130
        %1148 = vset.pattern.permute.xlu0 0
        %1149 = vperm.xlu0 %1148, %v1067
        %v1150 = vpop.permute.xlu0 %1149
        %1153 = vset.pattern.permute.xlu0 0
        %1154 = vperm.xlu0 %1153, %v1068
        %v1155 = vpop.permute.xlu0 %1154
        %1158 = vset.pattern.permute.xlu0 0
        %1159 = vperm.xlu0 %1158, %v1069
        %v1160 = vpop.permute.xlu0 %1159
        %1163 = vset.pattern.permute.xlu0 0
        %1164 = vperm.xlu0 %1163, %v1070
        %v1165 = vpop.permute.xlu0 %1164
        %v1167 = vmul.f32 %v1143, %v1150
        %v1168 = vmul.f32 %v1131, %v1150
        %v1169 = vmul.f32 %v1144, %v1155
        %v1170 = vmul.f32 %v1132, %v1155
        %v1171 = vmul.f32 %v1145, %v1160
        %v1172 = vmul.f32 %v1133, %v1160
        %v1173 = vmul.f32 %v1146, %v1165
        %v1174 = vmul.f32 %v1134, %v1165
        %v1175 = vsel %vm432, %v1167, 0.0
        %v1176 = vsel %vm433, %v1168, 0.0
        %v1177 = vsel %vm432, %v1169, 0.0
        %v1178 = vsel %vm433, %v1170, 0.0
        %v1179 = vsel %vm432, %v1171, 0.0
        %v1180 = vsel %vm433, %v1172, 0.0
        %v1181 = vsel %vm432, %v1173, 0.0
        %v1182 = vsel %vm433, %v1174, 0.0
        %v1183 = vadd.f32 %v1095, %v1175
        %v1184 = vadd.f32 %v1096, %v1176
        %v1185 = vadd.f32 %v1097, %v1177
        %v1186 = vadd.f32 %v1098, %v1178
        %v1187 = vadd.f32 %v1099, %v1179
        %v1188 = vadd.f32 %v1100, %v1180
        %v1189 = vadd.f32 %v1101, %v1181
        %v1190 = vadd.f32 %v1102, %v1182
        %1191 = vrot.lane.b32.xlu0 %v1060, 16
        %v1192 = vpop.permute.xlu0 %1191
        %1193 = vrot.lane.b32.xlu0 %v1062, 16
        %v1194 = vpop.permute.xlu0 %1193
        %1195 = vrot.lane.b32.xlu0 %v1064, 16
        %v1196 = vpop.permute.xlu0 %1195
        %1197 = vrot.lane.b32.xlu0 %v1066, 16
        %v1198 = vpop.permute.xlu0 %1197
        %1203 = vrot.lane.b32.xlu0 %v1059, 16
        %v1204 = vpop.permute.xlu0 %1203
        %1205 = vrot.lane.b32.xlu0 %v1061, 16
        %v1206 = vpop.permute.xlu0 %1205
        %1207 = vrot.lane.b32.xlu0 %v1063, 16
        %v1208 = vpop.permute.xlu0 %1207
        %1209 = vrot.lane.b32.xlu0 %v1065, 16
        %v1210 = vpop.permute.xlu0 %1209
        %v1211 = vsel %vm470, %v1204, %v1192
        %v1212 = vsel %vm470, %v1206, %v1194
        %v1213 = vsel %vm470, %v1208, %v1196
        %v1214 = vsel %vm470, %v1210, %v1198
        %v1223 = vsel %vm470, %v1192, %v1204
        %v1224 = vsel %vm470, %v1194, %v1206
        %v1225 = vsel %vm470, %v1196, %v1208
        %v1226 = vsel %vm470, %v1198, %v1210
        %1227 = vset.pattern.permute.xlu0 1
        %1228 = vperm.xlu0 %1227, %v1067
        %v1229 = vpop.permute.xlu0 %1228
        %1231 = vset.pattern.permute.xlu0 1
        %1232 = vperm.xlu0 %1231, %v1068
        %v1233 = vpop.permute.xlu0 %1232
        %1235 = vset.pattern.permute.xlu0 1
        %1236 = vperm.xlu0 %1235, %v1069
        %v1237 = vpop.permute.xlu0 %1236
        %1239 = vset.pattern.permute.xlu0 1
        %1240 = vperm.xlu0 %1239, %v1070
        %v1241 = vpop.permute.xlu0 %1240
        %v1243 = vmul.f32 %v1223, %v1229
        %v1244 = vmul.f32 %v1211, %v1229
        %v1245 = vmul.f32 %v1224, %v1233
        %v1246 = vmul.f32 %v1212, %v1233
        %v1247 = vmul.f32 %v1225, %v1237
        %v1248 = vmul.f32 %v1213, %v1237
        %v1249 = vmul.f32 %v1226, %v1241
        %v1250 = vmul.f32 %v1214, %v1241
        %v1251 = vsel %vm513, %v1243, 0.0
        %v1252 = vsel %vm514, %v1244, 0.0
        %v1253 = vsel %vm513, %v1245, 0.0
        %v1254 = vsel %vm514, %v1246, 0.0
        %v1255 = vsel %vm513, %v1247, 0.0
        %v1256 = vsel %vm514, %v1248, 0.0
        %v1257 = vsel %vm513, %v1249, 0.0
        %v1258 = vsel %vm514, %v1250, 0.0
        %v1259 = vadd.f32 %v1183, %v1251
        %v1260 = vadd.f32 %v1184, %v1252
        %v1261 = vadd.f32 %v1185, %v1253
        %v1262 = vadd.f32 %v1186, %v1254
        %v1263 = vadd.f32 %v1187, %v1255
        %v1264 = vadd.f32 %v1188, %v1256
        %v1265 = vadd.f32 %v1189, %v1257
        %v1266 = vadd.f32 %v1190, %v1258
        %1267 = vrot.lane.b32.xlu0 %v1060, 15
        %v1268 = vpop.permute.xlu0 %1267
        %1269 = vrot.lane.b32.xlu0 %v1062, 15
        %v1270 = vpop.permute.xlu0 %1269
        %1271 = vrot.lane.b32.xlu0 %v1064, 15
        %v1272 = vpop.permute.xlu0 %1271
        %1273 = vrot.lane.b32.xlu0 %v1066, 15
        %v1274 = vpop.permute.xlu0 %1273
        %1279 = vrot.lane.b32.xlu0 %v1059, 15
        %v1280 = vpop.permute.xlu0 %1279
        %1281 = vrot.lane.b32.xlu0 %v1061, 15
        %v1282 = vpop.permute.xlu0 %1281
        %1283 = vrot.lane.b32.xlu0 %v1063, 15
        %v1284 = vpop.permute.xlu0 %1283
        %1285 = vrot.lane.b32.xlu0 %v1065, 15
        %v1286 = vpop.permute.xlu0 %1285
        %v1287 = vsel %vm551, %v1280, %v1268
        %v1288 = vsel %vm551, %v1282, %v1270
        %v1289 = vsel %vm551, %v1284, %v1272
        %v1290 = vsel %vm551, %v1286, %v1274
        %v1299 = vsel %vm551, %v1268, %v1280
        %v1300 = vsel %vm551, %v1270, %v1282
        %v1301 = vsel %vm551, %v1272, %v1284
        %v1302 = vsel %vm551, %v1274, %v1286
        %1303 = vset.pattern.permute.xlu0 2
        %1304 = vperm.xlu0 %1303, %v1067
        %v1305 = vpop.permute.xlu0 %1304
        %1307 = vset.pattern.permute.xlu0 2
        %1308 = vperm.xlu0 %1307, %v1068
        %v1309 = vpop.permute.xlu0 %1308
        %1311 = vset.pattern.permute.xlu0 2
        %1312 = vperm.xlu0 %1311, %v1069
        %v1313 = vpop.permute.xlu0 %1312
        %1315 = vset.pattern.permute.xlu0 2
        %1316 = vperm.xlu0 %1315, %v1070
        %v1317 = vpop.permute.xlu0 %1316
        %v1319 = vmul.f32 %v1299, %v1305
        %v1320 = vmul.f32 %v1287, %v1305
        %v1321 = vmul.f32 %v1300, %v1309
        %v1322 = vmul.f32 %v1288, %v1309
        %v1323 = vmul.f32 %v1301, %v1313
        %v1324 = vmul.f32 %v1289, %v1313
        %v1325 = vmul.f32 %v1302, %v1317
        %v1326 = vmul.f32 %v1290, %v1317
        %v1327 = vsel %vm596, %v1319, 0.0
        %v1328 = vsel %vm597, %v1320, 0.0
        %v1329 = vsel %vm596, %v1321, 0.0
        %v1330 = vsel %vm597, %v1322, 0.0
        %v1331 = vsel %vm596, %v1323, 0.0
        %v1332 = vsel %vm597, %v1324, 0.0
        %v1333 = vsel %vm596, %v1325, 0.0
        %v1334 = vsel %vm597, %v1326, 0.0
        %v1335 = vadd.f32 %v1259, %v1327
        %v1336 = vadd.f32 %v1260, %v1328
        %v1337 = vadd.f32 %v1261, %v1329
        %v1338 = vadd.f32 %v1262, %v1330
        %v1339 = vadd.f32 %v1263, %v1331
        %v1340 = vadd.f32 %v1264, %v1332
        %v1341 = vadd.f32 %v1265, %v1333
        %v1342 = vadd.f32 %v1266, %v1334
        %1343 = vrot.lane.b32.xlu0 %v1060, 1
        %v1344 = vpop.permute.xlu0 %1343
        %1345 = vrot.lane.b32.xlu0 %v1062, 1
        %v1346 = vpop.permute.xlu0 %1345
        %1347 = vrot.lane.b32.xlu0 %v1064, 1
        %v1348 = vpop.permute.xlu0 %1347
        %1349 = vrot.lane.b32.xlu0 %v1066, 1
        %v1350 = vpop.permute.xlu0 %1349
        %1355 = vrot.lane.b32.xlu0 %v1059, 1
        %v1356 = vpop.permute.xlu0 %1355
        %1357 = vrot.lane.b32.xlu0 %v1061, 1
        %v1358 = vpop.permute.xlu0 %1357
        %1359 = vrot.lane.b32.xlu0 %v1063, 1
        %v1360 = vpop.permute.xlu0 %1359
        %1361 = vrot.lane.b32.xlu0 %v1065, 1
        %v1362 = vpop.permute.xlu0 %1361
        %v1363 = vsel %vm634, %v1356, %v1344
        %v1364 = vsel %vm634, %v1358, %v1346
        %v1365 = vsel %vm634, %v1360, %v1348
        %v1366 = vsel %vm634, %v1362, %v1350
        %v1375 = vsel %vm634, %v1344, %v1356
        %v1376 = vsel %vm634, %v1346, %v1358
        %v1377 = vsel %vm634, %v1348, %v1360
        %v1378 = vsel %vm634, %v1350, %v1362
        %1379 = vset.pattern.permute.xlu0 3
        %1380 = vperm.xlu0 %1379, %v1067
        %v1381 = vpop.permute.xlu0 %1380
        %1383 = vset.pattern.permute.xlu0 3
        %1384 = vperm.xlu0 %1383, %v1068
        %v1385 = vpop.permute.xlu0 %1384
        %1387 = vset.pattern.permute.xlu0 3
        %1388 = vperm.xlu0 %1387, %v1069
        %v1389 = vpop.permute.xlu0 %1388
        %1391 = vset.pattern.permute.xlu0 3
        %1392 = vperm.xlu0 %1391, %v1070
        %v1393 = vpop.permute.xlu0 %1392
        %v1395 = vmul.f32 %v1375, %v1381
        %v1396 = vmul.f32 %v1363, %v1381
        %v1397 = vmul.f32 %v1376, %v1385
        %v1398 = vmul.f32 %v1364, %v1385
        %v1399 = vmul.f32 %v1377, %v1389
        %v1400 = vmul.f32 %v1365, %v1389
        %v1401 = vmul.f32 %v1378, %v1393
        %v1402 = vmul.f32 %v1366, %v1393
        %v1403 = vsel %vm675, %v1395, 0.0
        %v1404 = vsel %vm676, %v1396, 0.0
        %v1405 = vsel %vm675, %v1397, 0.0
        %v1406 = vsel %vm676, %v1398, 0.0
        %v1407 = vsel %vm675, %v1399, 0.0
        %v1408 = vsel %vm676, %v1400, 0.0
        %v1409 = vsel %vm675, %v1401, 0.0
        %v1410 = vsel %vm676, %v1402, 0.0
        %v1411 = vadd.f32 %v1335, %v1403
        %v1412 = vadd.f32 %v1336, %v1404
        %v1413 = vadd.f32 %v1337, %v1405
        %v1414 = vadd.f32 %v1338, %v1406
        %v1415 = vadd.f32 %v1339, %v1407
        %v1416 = vadd.f32 %v1340, %v1408
        %v1417 = vadd.f32 %v1341, %v1409
        %v1418 = vadd.f32 %v1342, %v1410
        %1419 = vset.pattern.permute.xlu0 4
        %1420 = vperm.xlu0 %1419, %v1067
        %v1421 = vpop.permute.xlu0 %1420
        %1423 = vset.pattern.permute.xlu0 4
        %1424 = vperm.xlu0 %1423, %v1068
        %v1425 = vpop.permute.xlu0 %1424
        %1427 = vset.pattern.permute.xlu0 4
        %1428 = vperm.xlu0 %1427, %v1069
        %v1429 = vpop.permute.xlu0 %1428
        %1431 = vset.pattern.permute.xlu0 4
        %1432 = vperm.xlu0 %1431, %v1070
        %v1433 = vpop.permute.xlu0 %1432
        %v1435 = vmul.f32 %v1059, %v1421
        %v1436 = vmul.f32 %v1060, %v1421
        %v1437 = vmul.f32 %v1061, %v1425
        %v1438 = vmul.f32 %v1062, %v1425
        %v1439 = vmul.f32 %v1063, %v1429
        %v1440 = vmul.f32 %v1064, %v1429
        %v1441 = vmul.f32 %v1065, %v1433
        %v1442 = vmul.f32 %v1066, %v1433
        %v1443 = vadd.f32 %v1411, %v1435
        %v1444 = vadd.f32 %v1412, %v1436
        %v1445 = vadd.f32 %v1413, %v1437
        %v1446 = vadd.f32 %v1414, %v1438
        %v1447 = vadd.f32 %v1415, %v1439
        %v1448 = vadd.f32 %v1416, %v1440
        %v1449 = vadd.f32 %v1417, %v1441
        %v1450 = vadd.f32 %v1418, %v1442
        %1451 = vrot.lane.b32.xlu0 %v1059, 127
        %v1452 = vpop.permute.xlu0 %1451
        %1453 = vrot.lane.b32.xlu0 %v1060, 127
        %v1454 = vpop.permute.xlu0 %1453
        %1455 = vrot.lane.b32.xlu0 %v1061, 127
        %v1456 = vpop.permute.xlu0 %1455
        %1457 = vrot.lane.b32.xlu0 %v1062, 127
        %v1458 = vpop.permute.xlu0 %1457
        %1459 = vrot.lane.b32.xlu0 %v1063, 127
        %v1460 = vpop.permute.xlu0 %1459
        %1461 = vrot.lane.b32.xlu0 %v1064, 127
        %v1462 = vpop.permute.xlu0 %1461
        %1463 = vrot.lane.b32.xlu0 %v1065, 127
        %v1464 = vpop.permute.xlu0 %1463
        %1465 = vrot.lane.b32.xlu0 %v1066, 127
        %v1466 = vpop.permute.xlu0 %1465
        %v1467 = vsel %vm741, %v1452, %v1454
        %v1468 = vsel %vm741, %v1456, %v1458
        %v1469 = vsel %vm741, %v1460, %v1462
        %v1470 = vsel %vm741, %v1464, %v1466
        %v1483 = vsel %vm741, %v1454, %v1452
        %v1484 = vsel %vm741, %v1458, %v1456
        %v1485 = vsel %vm741, %v1462, %v1460
        %v1486 = vsel %vm741, %v1466, %v1464
        %1487 = vset.pattern.permute.xlu0 5
        %1488 = vperm.xlu0 %1487, %v1067
        %v1489 = vpop.permute.xlu0 %1488
        %1491 = vset.pattern.permute.xlu0 5
        %1492 = vperm.xlu0 %1491, %v1068
        %v1493 = vpop.permute.xlu0 %1492
        %1495 = vset.pattern.permute.xlu0 5
        %1496 = vperm.xlu0 %1495, %v1069
        %v1497 = vpop.permute.xlu0 %1496
        %1499 = vset.pattern.permute.xlu0 5
        %1500 = vperm.xlu0 %1499, %v1070
        %v1501 = vpop.permute.xlu0 %1500
        %v1503 = vmul.f32 %v1467, %v1489
        %v1504 = vmul.f32 %v1483, %v1489
        %v1505 = vmul.f32 %v1468, %v1493
        %v1506 = vmul.f32 %v1484, %v1493
        %v1507 = vmul.f32 %v1469, %v1497
        %v1508 = vmul.f32 %v1485, %v1497
        %v1509 = vmul.f32 %v1470, %v1501
        %v1510 = vmul.f32 %v1486, %v1501
        %v1511 = vsel %vm786, %v1503, 0.0
        %v1512 = vsel %vm787, %v1504, 0.0
        %v1513 = vsel %vm786, %v1505, 0.0
        %v1514 = vsel %vm787, %v1506, 0.0
        %v1515 = vsel %vm786, %v1507, 0.0
        %v1516 = vsel %vm787, %v1508, 0.0
        %v1517 = vsel %vm786, %v1509, 0.0
        %v1518 = vsel %vm787, %v1510, 0.0
        %v1519 = vadd.f32 %v1443, %v1511
        %v1520 = vadd.f32 %v1444, %v1512
        %v1521 = vadd.f32 %v1445, %v1513
        %v1522 = vadd.f32 %v1446, %v1514
        %v1523 = vadd.f32 %v1447, %v1515
        %v1524 = vadd.f32 %v1448, %v1516
        %v1525 = vadd.f32 %v1449, %v1517
        %v1526 = vadd.f32 %v1450, %v1518
        %1527 = vrot.lane.b32.xlu0 %v1059, 113
        %v1528 = vpop.permute.xlu0 %1527
        %1529 = vrot.lane.b32.xlu0 %v1060, 113
        %v1530 = vpop.permute.xlu0 %1529
        %1531 = vrot.lane.b32.xlu0 %v1061, 113
        %v1532 = vpop.permute.xlu0 %1531
        %1533 = vrot.lane.b32.xlu0 %v1062, 113
        %v1534 = vpop.permute.xlu0 %1533
        %1535 = vrot.lane.b32.xlu0 %v1063, 113
        %v1536 = vpop.permute.xlu0 %1535
        %1537 = vrot.lane.b32.xlu0 %v1064, 113
        %v1538 = vpop.permute.xlu0 %1537
        %1539 = vrot.lane.b32.xlu0 %v1065, 113
        %v1540 = vpop.permute.xlu0 %1539
        %1541 = vrot.lane.b32.xlu0 %v1066, 113
        %v1542 = vpop.permute.xlu0 %1541
        %v1543 = vsel %vm820, %v1528, %v1530
        %v1544 = vsel %vm820, %v1532, %v1534
        %v1545 = vsel %vm820, %v1536, %v1538
        %v1546 = vsel %vm820, %v1540, %v1542
        %v1559 = vsel %vm820, %v1530, %v1528
        %v1560 = vsel %vm820, %v1534, %v1532
        %v1561 = vsel %vm820, %v1538, %v1536
        %v1562 = vsel %vm820, %v1542, %v1540
        %1563 = vset.pattern.permute.xlu0 6
        %1564 = vperm.xlu0 %1563, %v1067
        %v1565 = vpop.permute.xlu0 %1564
        %1567 = vset.pattern.permute.xlu0 6
        %1568 = vperm.xlu0 %1567, %v1068
        %v1569 = vpop.permute.xlu0 %1568
        %1571 = vset.pattern.permute.xlu0 6
        %1572 = vperm.xlu0 %1571, %v1069
        %v1573 = vpop.permute.xlu0 %1572
        %1575 = vset.pattern.permute.xlu0 6
        %1576 = vperm.xlu0 %1575, %v1070
        %v1577 = vpop.permute.xlu0 %1576
        %v1579 = vmul.f32 %v1543, %v1565
        %v1580 = vmul.f32 %v1559, %v1565
        %v1581 = vmul.f32 %v1544, %v1569
        %v1582 = vmul.f32 %v1560, %v1569
        %v1583 = vmul.f32 %v1545, %v1573
        %v1584 = vmul.f32 %v1561, %v1573
        %v1585 = vmul.f32 %v1546, %v1577
        %v1586 = vmul.f32 %v1562, %v1577
        %v1587 = vsel %vm869, %v1579, 0.0
        %v1588 = vsel %vm870, %v1580, 0.0
        %v1589 = vsel %vm869, %v1581, 0.0
        %v1590 = vsel %vm870, %v1582, 0.0
        %v1591 = vsel %vm869, %v1583, 0.0
        %v1592 = vsel %vm870, %v1584, 0.0
        %v1593 = vsel %vm869, %v1585, 0.0
        %v1594 = vsel %vm870, %v1586, 0.0
        %v1595 = vadd.f32 %v1519, %v1587
        %v1596 = vadd.f32 %v1520, %v1588
        %v1597 = vadd.f32 %v1521, %v1589
        %v1598 = vadd.f32 %v1522, %v1590
        %v1599 = vadd.f32 %v1523, %v1591
        %v1600 = vadd.f32 %v1524, %v1592
        %v1601 = vadd.f32 %v1525, %v1593
        %v1602 = vadd.f32 %v1526, %v1594
        %1603 = vrot.lane.b32.xlu0 %v1059, 112
        %v1604 = vpop.permute.xlu0 %1603
        %1605 = vrot.lane.b32.xlu0 %v1060, 112
        %v1606 = vpop.permute.xlu0 %1605
        %1607 = vrot.lane.b32.xlu0 %v1061, 112
        %v1608 = vpop.permute.xlu0 %1607
        %1609 = vrot.lane.b32.xlu0 %v1062, 112
        %v1610 = vpop.permute.xlu0 %1609
        %1611 = vrot.lane.b32.xlu0 %v1063, 112
        %v1612 = vpop.permute.xlu0 %1611
        %1613 = vrot.lane.b32.xlu0 %v1064, 112
        %v1614 = vpop.permute.xlu0 %1613
        %1615 = vrot.lane.b32.xlu0 %v1065, 112
        %v1616 = vpop.permute.xlu0 %1615
        %1617 = vrot.lane.b32.xlu0 %v1066, 112
        %v1618 = vpop.permute.xlu0 %1617
        %v1619 = vsel %vm903, %v1604, %v1606
        %v1620 = vsel %vm903, %v1608, %v1610
        %v1621 = vsel %vm903, %v1612, %v1614
        %v1622 = vsel %vm903, %v1616, %v1618
        %v1635 = vsel %vm903, %v1606, %v1604
        %v1636 = vsel %vm903, %v1610, %v1608
        %v1637 = vsel %vm903, %v1614, %v1612
        %v1638 = vsel %vm903, %v1618, %v1616
        %1639 = vset.pattern.permute.xlu0 7
        %1640 = vperm.xlu0 %1639, %v1067
        %v1641 = vpop.permute.xlu0 %1640
        %1643 = vset.pattern.permute.xlu0 7
        %1644 = vperm.xlu0 %1643, %v1068
        %v1645 = vpop.permute.xlu0 %1644
        %1647 = vset.pattern.permute.xlu0 7
        %1648 = vperm.xlu0 %1647, %v1069
        %v1649 = vpop.permute.xlu0 %1648
        %1651 = vset.pattern.permute.xlu0 7
        %1652 = vperm.xlu0 %1651, %v1070
        %v1653 = vpop.permute.xlu0 %1652
        %v1655 = vmul.f32 %v1619, %v1641
        %v1656 = vmul.f32 %v1635, %v1641
        %v1657 = vmul.f32 %v1620, %v1645
        %v1658 = vmul.f32 %v1636, %v1645
        %v1659 = vmul.f32 %v1621, %v1649
        %v1660 = vmul.f32 %v1637, %v1649
        %v1661 = vmul.f32 %v1622, %v1653
        %v1662 = vmul.f32 %v1638, %v1653
        %v1663 = vsel %vm950, %v1655, 0.0
        %v1664 = vsel %vm951, %v1656, 0.0
        %v1665 = vsel %vm950, %v1657, 0.0
        %v1666 = vsel %vm951, %v1658, 0.0
        %v1667 = vsel %vm950, %v1659, 0.0
        %v1668 = vsel %vm951, %v1660, 0.0
        %v1669 = vsel %vm950, %v1661, 0.0
        %v1670 = vsel %vm951, %v1662, 0.0
        %v1671 = vadd.f32 %v1595, %v1663
        %v1672 = vadd.f32 %v1596, %v1664
        %v1673 = vadd.f32 %v1597, %v1665
        %v1674 = vadd.f32 %v1598, %v1666
        %v1675 = vadd.f32 %v1599, %v1667
        %v1676 = vadd.f32 %v1600, %v1668
        %v1677 = vadd.f32 %v1601, %v1669
        %v1678 = vadd.f32 %v1602, %v1670
        %1679 = vrot.lane.b32.xlu0 %v1059, 111
        %v1680 = vpop.permute.xlu0 %1679
        %1681 = vrot.lane.b32.xlu0 %v1060, 111
        %v1682 = vpop.permute.xlu0 %1681
        %1683 = vrot.lane.b32.xlu0 %v1061, 111
        %v1684 = vpop.permute.xlu0 %1683
        %1685 = vrot.lane.b32.xlu0 %v1062, 111
        %v1686 = vpop.permute.xlu0 %1685
        %1687 = vrot.lane.b32.xlu0 %v1063, 111
        %v1688 = vpop.permute.xlu0 %1687
        %1689 = vrot.lane.b32.xlu0 %v1064, 111
        %v1690 = vpop.permute.xlu0 %1689
        %1691 = vrot.lane.b32.xlu0 %v1065, 111
        %v1692 = vpop.permute.xlu0 %1691
        %1693 = vrot.lane.b32.xlu0 %v1066, 111
        %v1694 = vpop.permute.xlu0 %1693
        %v1695 = vsel %vm984, %v1680, %v1682
        %v1696 = vsel %vm984, %v1684, %v1686
        %v1697 = vsel %vm984, %v1688, %v1690
        %v1698 = vsel %vm984, %v1692, %v1694
        %v1711 = vsel %vm984, %v1682, %v1680
        %v1712 = vsel %vm984, %v1686, %v1684
        %v1713 = vsel %vm984, %v1690, %v1688
        %v1714 = vsel %vm984, %v1694, %v1692
        %1715 = vset.pattern.permute.xlu0 8
        %1716 = vperm.xlu0 %1715, %v1067
        %v1717 = vpop.permute.xlu0 %1716
        %1719 = vset.pattern.permute.xlu0 8
        %1720 = vperm.xlu0 %1719, %v1068
        %v1721 = vpop.permute.xlu0 %1720
        %1723 = vset.pattern.permute.xlu0 8
        %1724 = vperm.xlu0 %1723, %v1069
        %v1725 = vpop.permute.xlu0 %1724
        %1727 = vset.pattern.permute.xlu0 8
        %1728 = vperm.xlu0 %1727, %v1070
        %v1729 = vpop.permute.xlu0 %1728
        %v1731 = vmul.f32 %v1695, %v1717
        %v1732 = vmul.f32 %v1711, %v1717
        %v1733 = vmul.f32 %v1696, %v1721
        %v1734 = vmul.f32 %v1712, %v1721
        %v1735 = vmul.f32 %v1697, %v1725
        %v1736 = vmul.f32 %v1713, %v1725
        %v1737 = vmul.f32 %v1698, %v1729
        %v1738 = vmul.f32 %v1714, %v1729
        %v1739 = vsel %vm1033, %v1731, 0.0
        %v1740 = vsel %vm1034, %v1732, 0.0
        %v1741 = vsel %vm1033, %v1733, 0.0
        %v1742 = vsel %vm1034, %v1734, 0.0
        %v1743 = vsel %vm1033, %v1735, 0.0
        %v1744 = vsel %vm1034, %v1736, 0.0
        %v1745 = vsel %vm1033, %v1737, 0.0
        %v1746 = vsel %vm1034, %v1738, 0.0
        %v1747 = vadd.f32 %v1671, %v1739
        %v1748 = vadd.f32 %v1672, %v1740
        %v1749 = vadd.f32 %v1673, %v1741
        %v1750 = vadd.f32 %v1674, %v1742
        %v1751 = vadd.f32 %v1675, %v1743
        %v1752 = vadd.f32 %v1676, %v1744
        %v1753 = vadd.f32 %v1677, %v1745
        %v1754 = vadd.f32 %v1678, %v1746
        %1755 = vst [vmem:[%s268 + $0x40] sm:$0xff] %v1747
        %1756 = vst [vmem:[%s268 + $0x48] sm:$0xff] %v1748
        %1757 = vst [vmem:[%s268 + $0x50] sm:$0xff] %v1749
        %1758 = vst [vmem:[%s268 + $0x58] sm:$0xff] %v1750
        %1759 = vst [vmem:[%s268 + $0x60] sm:$0xff] %v1751
        %1760 = vst [vmem:[%s268 + $0x68] sm:$0xff] %v1752
        %1761 = vst [vmem:[%s268 + $0x70] sm:$0xff] %v1753
        %1762 = vst [vmem:[%s268 + $0x78] sm:$0xff] %v1754
        %s1763 = sand.u32 %s144, 1
        %s1764 = scalar_lea.sflag [#allocation4], %s1763
        %s1765 = sand.u32 %s144, 1
        %s1766 = smul.addr %s1765, 128
        %s1767 = scalar_lea.vmem [#allocation5], %s1766
        // Predicated region
        $region41: #{tpu_custom_call.1} parent=35 // pred_check
          %p1768 = pneg %p154
        $region42: #{tpu_custom_call.1} parent=35 // pred_check_branch
          %1770 = sbr.rel (%p1768) target = $region44
        $region43: #{tpu_custom_call.1} parent=35 // pred_region
          %s1771 = smul.u32 8, %s25
          %1773 = vsyncadd %s1764, 0
          %s1774 = smul.addr %s1771, 2
          %s1775 = smul.addr %s26, 64
          %s1776 = sadd.s32 %s1774, %s1775
          %s1777 = smul.addr %s1776, 8
          %s1778 = scalar_lea.hbm %s4, %s1777
          %s1779 = sshll.u32 %s1767, 4
          %s1780 = int_to_ptr.vmem [resolvable:$true] %s1779
          %s1781 = sshll.u32 %s1778, 4
          %s1782 = int_to_ptr.hbm [resolvable:$true] %s1781
          %1787 = dma.vmem_to_hbm [thread:$0]  %s1780, 2048, %s1782, %s1764, 256, 256, 16
        $region44: #{tpu_custom_call.1} parent=35 // pred_fallthru
          _
      $region36: #{tpu_custom_call.1} parent=5 // pred_fallthru
        _
      %p1788 = scmp.le.s32.totalorder 2, %s16
      // Predicated region
      $region45: #{tpu_custom_call.1} parent=5 // pred_check
        %p1789 = pneg %p1788
      $region46: #{tpu_custom_call.1} parent=5 // pred_check_branch
        %1791 = sbr.rel (%p1789) target = $region48
      $region47: #{tpu_custom_call.1} parent=5 // pred_region
        %s1792 = ssub.s32 %s16, 2
        // Predicated region
        $region49: #{tpu_custom_call.1} parent=47 // pred_check
          %p1793 = pneg %p160
        $region50: #{tpu_custom_call.1} parent=47 // pred_check_branch
          %1795 = sbr.rel (%p1793) target = $region52
        $region51: #{tpu_custom_call.1} parent=47 // pred_region
          %s1796 = sand.u32 %s145, 1
          %s1797 = scalar_lea.sflag [#allocation4], %s1796
          %s1798 = sand.u32 %s145, 1
          %s1799 = smul.addr %s1798, 128
          %s1800 = scalar_lea.vmem [#allocation5], %s1799
          %1802 = dma.done %s1797, 2048
        $region52: #{tpu_custom_call.1} parent=47 // pred_fallthru
          _
      $region48: #{tpu_custom_call.1} parent=5 // pred_fallthru
        _
    $region6: #{tpu_custom_call.1} parent=1 // loop_footer
      %s20 = sadd.s32 1, %s16
    $region7: #{tpu_custom_call.1} parent=1 // loop_footer_branch
      %15 = sbr.rel target = $region3
    $region8: #{tpu_custom_call.1} parent=1 // loop_exit
      _
    %1803 = vsyncpa [#allocation3], 1
    %s1804 = scalar_lea.sflag [#allocation3], 1
    %1805 = vsyncpa %s1804, 1
    %1806 = vsyncpa [#allocation4], 1
    %s1807 = scalar_lea.sflag [#allocation4], 1
    %1808 = vsyncpa %s1807, 1

</llo_original>
